<compile_context>
chip_gen: v7x
topology: tpu7x:2x2x1
jax: 0.10.0
libtpu: 0.0.40
codegen_flags: <defaults>
</compile_context>

<pallas_src>
import math
import functools

import jax
import jax.numpy as jnp
import numpy as np
from jax.experimental import pallas as pl
from jax.experimental.pallas import tpu as pltpu


def _pos_embed_kernel(z_ref, y_ref, x_ref, inv_ref, ph_ref, out_ref, *,
                      num_pos_feats):
    """One (batch, frame-block) grid step.

    z_ref / y_ref / x_ref : (1, tt, 1, HWp) f32  cumsums over frames / rows / cols
    inv_ref / ph_ref      : (1, F, 1)       f32  1/dim_t and sin-phase tables
    out_ref               : (1, tt, 3F+4, HWp)
    """
    F = num_pos_feats
    _, tt, c_out, hwp = out_ref.shape

    inv = inv_ref[...]                      # (1, F, 1)
    ph = ph_ref[...]                        # (1, F, 1)

    # (tt,1,HWp) * (1,F,1) + (1,F,1) -> (tt,F,HWp); one sin per channel
    # (cos(x) == sin(x + pi/2)).  Frames are vectorized: no in-kernel loop,
    # one broadcast per channel group.
    out_ref[0, :, 0:F, :] = jnp.sin(z_ref[0] * inv + ph).astype(out_ref.dtype)
    out_ref[0, :, F:2 * F, :] = jnp.sin(y_ref[0] * inv + ph).astype(out_ref.dtype)
    out_ref[0, :, 2 * F:3 * F, :] = jnp.sin(x_ref[0] * inv + ph).astype(out_ref.dtype)
    # 4 zero-pad channels: direct zero store, no transcendental / select work.
    out_ref[0, :, 3 * F:, :] = jnp.zeros((tt, c_out - 3 * F, hwp), out_ref.dtype)


def _vmem_budgets():
    """Generation-aware VMEM limit and (double-buffered) block budget."""
    try:
        cap = int(pltpu.get_tpu_info().vmem_capacity_bytes)
    except Exception:
        cap = 64 * 1024 * 1024                       # conservative (v7x-sized)
    # ~45% of physical VMEM for this call (leaves room for compiler scratch),
    # capped so we never hand Mosaic an absurd limit.
    vmem_limit = max(16 * 1024 * 1024, min(int(cap * 0.45), 96 * 1024 * 1024))
    block_budget = int(vmem_limit * 0.75)
    return vmem_limit, block_budget


def _pick_frames_per_block(num_frames, c_out, hw_pad, budget):
    """Largest divisor of num_frames whose double-buffered blocks fit budget.
    (Divisibility is now a perf-only concern: there is no carried state.)"""
    best = 1
    for d in range(1, num_frames + 1):
        if d > 32:
            break
        if num_frames % d:
            continue
        block_bytes = d * hw_pad * 4 * (c_out + 3)    # output block + 3 inputs
        if 2 * block_bytes <= budget:
            best = d
    return best


def position_embedding_spatial_temporal_sine(mask, *, num_pos_feats=64,
                                             num_frames=36, temperature=10000,
                                             normalize=False, scale=None,
                                             out_dtype=jnp.float32):
    """mask: (N, H, W) bool with N = batch * num_frames.
    Returns (N // num_frames, num_frames, 3*num_pos_feats + 4, H, W)."""
    if scale is not None and not normalize:
        raise ValueError('normalize should be True if scale is passed')
    if normalize:
        # TODO(synk): normalize=True needs the final cumsum totals (last frame /
        # last row / last col); not implemented here.
        raise NotImplementedError('normalize=True is not implemented')

    n, h, w = mask.shape
    assert n % num_frames == 0
    b = n // num_frames
    hw = h * w
    F = num_pos_feats
    c_out = 3 * F + 4

    not_mask = jnp.logical_not(mask).reshape(b, num_frames, h, w).astype(jnp.float32)
    # All three cumsums are cheap XLA (<2% of the kernel's output traffic).
    # Hoisting the temporal one removes the sequential carry entirely, so the
    # kernel grid has no ordering requirements.
    z_embed = jnp.cumsum(not_mask, axis=1)
    y_embed = jnp.cumsum(not_mask, axis=2)
    x_embed = jnp.cumsum(not_mask, axis=3)

    # Lane-dense flattened HW axis, padded to a multiple of 128 so every output
    # row is a full unmasked 128-lane store.  Pad values are sliced off later.
    hw_pad = ((hw + 127) // 128) * 128

    def flat(e):
        e = e.reshape(b, num_frames, 1, hw)
        if hw_pad != hw:
            e = jnp.pad(e, ((0, 0), (0, 0), (0, 0), (0, hw_pad - hw)))
        return e

    z_flat, y_flat, x_flat = flat(z_embed), flat(y_embed), flat(x_embed)

    # Per-channel reciprocal frequency and sin-phase (cos(x) == sin(x + pi/2)),
    # computed once here instead of rebuilt every grid step.
    # dim_t[j] = temperature ** (2*(j//2)/F)  ->  inv[j] = exp(-(2*(j//2)/F)*ln(T)).
    j = jnp.arange(F, dtype=jnp.float32)
    half = jnp.floor(j * 0.5)
    inv_tab = jnp.exp(half * (-2.0 * math.log(float(temperature)) / float(F)))
    ph_tab = (j - 2.0 * half) * (math.pi / 2.0)
    inv_tab = inv_tab.reshape(1, F, 1)
    ph_tab = ph_tab.reshape(1, F, 1)

    vmem_limit, block_budget = _vmem_budgets()
    tt = _pick_frames_per_block(num_frames, c_out, hw_pad, block_budget)

    kernel = functools.partial(_pos_embed_kernel, num_pos_feats=F)

    emb_spec = lambda: pl.BlockSpec((1, tt, 1, hw_pad), lambda bi, ti: (bi, ti, 0, 0))
    tab_spec = lambda: pl.BlockSpec((1, F, 1), lambda bi, ti: (0, 0, 0))

    n_elem = b * num_frames * hw_pad
    cost = pl.CostEstimate(
        flops=2 * 3 * F * n_elem,
        transcendentals=3 * F * n_elem,
        bytes_accessed=c_out * n_elem * jnp.dtype(out_dtype).itemsize
                       + 3 * n_elem * 4)

    out = pl.pallas_call(
        kernel,
        out_shape=jax.ShapeDtypeStruct((b, num_frames, c_out, hw_pad), out_dtype),
        grid_spec=pltpu.PrefetchScalarGridSpec(
            num_scalar_prefetch=0,
            grid=(b, num_frames // tt),
            in_specs=[emb_spec(), emb_spec(), emb_spec(), tab_spec(), tab_spec()],
            out_specs=pl.BlockSpec((1, tt, c_out, hw_pad),
                                   lambda bi, ti: (bi, ti, 0, 0)),
        ),
        compiler_params=pltpu.CompilerParams(
            # No carried state -> both grid axes are freely shardable.
            dimension_semantics=("parallel", "parallel"),
            vmem_limit_bytes=vmem_limit),
        cost_estimate=cost,
    )(z_flat, y_flat, x_flat, inv_tab, ph_tab)

    if hw_pad != hw:
        out = out[..., :hw]
    return out.reshape(b, num_frames, c_out, h, w)


def _reference(mask, *, num_pos_feats, num_frames, temperature):
    """Pure-JAX mirror of the PyTorch forward (normalize=False)."""
    n, h, w = mask.shape
    b = n // num_frames
    not_mask = (~mask).reshape(b, num_frames, h, w).astype(jnp.float32)
    z_embed = jnp.cumsum(not_mask, axis=1)
    y_embed = jnp.cumsum(not_mask, axis=2)
    x_embed = jnp.cumsum(not_mask, axis=3)
    dim_t = jnp.arange(num_pos_feats, dtype=jnp.float32)
    dim_t = temperature ** (2.0 * jnp.floor(dim_t / 2.0) / num_pos_feats)

    def enc(e):
        p = e[..., None] / dim_t
        s = jnp.stack((jnp.sin(p[..., 0::2]), jnp.cos(p[..., 1::2])), axis=5)
        return s.reshape(p.shape[:4] + (num_pos_feats,))

    pos = jnp.concatenate((enc(z_embed), enc(y_embed), enc(x_embed)), axis=4)
    pos = jnp.transpose(pos, (0, 1, 4, 2, 3))
    pad = jnp.zeros(pos.shape[:2] + (4,) + pos.shape[3:], jnp.float32)
    return jnp.concatenate([pos, pad], axis=2)


if __name__ == "__main__":
    key = jax.random.PRNGKey(0)

    # Case 1: lane-aligned spatial map (H*W == 128): batch=2, frames=4, F=8.
    num_pos_feats, num_frames, batch, H, W = 8, 4, 2, 8, 16
    k1, k2 = jax.random.split(key)
    mask = jax.random.bernoulli(k1, 0.3, (batch * num_frames, H, W))
    out = position_embedding_spatial_temporal_sine(
        mask, num_pos_feats=num_pos_feats, num_frames=num_frames,
        temperature=10000, normalize=False)
    out = jax.block_until_ready(out)
    ref = jax.block_until_ready(_reference(
        mask, num_pos_feats=num_pos_feats, num_frames=num_frames, temperature=10000))
    assert out.shape == (batch, num_frames, 3 * num_pos_feats + 4, H, W)
    np.testing.assert_allclose(np.asarray(out), np.asarray(ref),
                               rtol=1e-5, atol=3e-5)

    # Case 2: non-128-multiple H*W (exercises the lane padding path), batch=1.
    num_pos_feats2, num_frames2, batch2, H2, W2 = 8, 6, 1, 7, 10
    mask2 = jax.random.bernoulli(k2, 0.3, (batch2 * num_frames2, H2, W2))
    out2 = position_embedding_spatial_temporal_sine(
        mask2, num_pos_feats=num_pos_feats2, num_frames=num_frames2,
        temperature=10000, normalize=False)
    out2 = jax.block_until_ready(out2)
    ref2 = jax.block_until_ready(_reference(
        mask2, num_pos_feats=num_pos_feats2, num_frames=num_frames2, temperature=10000))
    assert out2.shape == (batch2, num_frames2, 3 * num_pos_feats2 + 4, H2, W2)
    np.testing.assert_allclose(np.asarray(out2), np.asarray(ref2),
                               rtol=1e-5, atol=3e-5)

    print("KERNEL_OK")
</pallas_src>

<mosaic_0001>
module attributes {stable_mosaic.version = 11 : i64} {
  func.func @_pos_embed_kernel(%arg0: i32, %arg1: i32, %arg2: memref<1x4x1x128xf32, #tpu.memory_space<vmem>>, %arg3: memref<1x4x1x128xf32, #tpu.memory_space<vmem>>, %arg4: memref<1x4x1x128xf32, #tpu.memory_space<vmem>>, %arg5: memref<1x8x1xf32, #tpu.memory_space<vmem>>, %arg6: memref<1x8x1xf32, #tpu.memory_space<vmem>>, %arg7: memref<1x4x28x128xf32, #tpu.memory_space<vmem>>) attributes {dimension_semantics = [#tpu.dimension_semantics<parallel>, #tpu.dimension_semantics<parallel>], iteration_bounds = array<i64: 2, 1>, scalar_prefetch = 0 : i64, scratch_operands = 0 : i64, tpu.core_type = #tpu.core_type<tc>, window_params = [{transform_indices = @transform_0, window_bounds = array<i64: 1, 4, 1, 128>}, {transform_indices = @transform_1, window_bounds = array<i64: 1, 4, 1, 128>}, {transform_indices = @transform_2, window_bounds = array<i64: 1, 4, 1, 128>}, {pipeline_mode = #tpu.pipeline_mode<synchronous>, transform_indices = @transform_3, window_bounds = array<i64: 1, 8, 1>}, {pipeline_mode = #tpu.pipeline_mode<synchronous>, transform_indices = @transform_4, window_bounds = array<i64: 1, 8, 1>}, {transform_indices = @transform_5, window_bounds = array<i64: 1, 4, 28, 128>}]} {
    %c0 = arith.constant 0 : index
    %c0_0 = arith.constant 0 : index
    %c0_1 = arith.constant 0 : index
    %0 = vector.load %arg5[%c0, %c0_0, %c0_1] : memref<1x8x1xf32, #tpu.memory_space<vmem>>, vector<1x8x1xf32>
    %c0_2 = arith.constant 0 : index
    %c0_3 = arith.constant 0 : index
    %c0_4 = arith.constant 0 : index
    %1 = vector.load %arg6[%c0_2, %c0_3, %c0_4] : memref<1x8x1xf32, #tpu.memory_space<vmem>>, vector<1x8x1xf32>
    %c0_5 = arith.constant 0 : index
    %c0_6 = arith.constant 0 : index
    %c0_7 = arith.constant 0 : index
    %c0_8 = arith.constant 0 : index
    %2 = vector.load %arg2[%c0_5, %c0_6, %c0_7, %c0_8] : memref<1x4x1x128xf32, #tpu.memory_space<vmem>>, vector<1x4x1x128xf32>
    %3 = vector.shape_cast %2 : vector<1x4x1x128xf32> to vector<4x1x128xf32>
    %4 = vector.broadcast %3 : vector<4x1x128xf32> to vector<4x8x128xf32>
    %5 = vector.broadcast %0 : vector<1x8x1xf32> to vector<4x8x128xf32>
    %6 = arith.mulf %4, %5 : vector<4x8x128xf32>
    %7 = vector.broadcast %1 : vector<1x8x1xf32> to vector<4x8x128xf32>
    %8 = arith.addf %6, %7 : vector<4x8x128xf32>
    %9 = math.sin %8 : vector<4x8x128xf32>
    %c0_9 = arith.constant 0 : index
    %c0_10 = arith.constant 0 : index
    %c0_11 = arith.constant 0 : index
    %c0_12 = arith.constant 0 : index
    %10 = vector.load %arg7[%c0_9, %c0_10, %c0_11, %c0_12] : memref<1x4x28x128xf32, #tpu.memory_space<vmem>>, vector<1x4x8x128xf32>
    %11 = vector.shape_cast %10 : vector<1x4x8x128xf32> to vector<4x8x128xf32>
    %12 = vector.shape_cast %9 : vector<4x8x128xf32> to vector<1x4x8x128xf32>
    tpu.vector_store %arg7[%c0_9, %c0_10, %c0_11, %c0_12], %12 {strides = array<i32>} : memref<1x4x28x128xf32, #tpu.memory_space<vmem>>, vector<1x4x8x128xf32>,
    %c0_13 = arith.constant 0 : index
    %c0_14 = arith.constant 0 : index
    %c0_15 = arith.constant 0 : index
    %c0_16 = arith.constant 0 : index
    %13 = vector.load %arg3[%c0_13, %c0_14, %c0_15, %c0_16] : memref<1x4x1x128xf32, #tpu.memory_space<vmem>>, vector<1x4x1x128xf32>
    %14 = vector.shape_cast %13 : vector<1x4x1x128xf32> to vector<4x1x128xf32>
    %15 = vector.broadcast %14 : vector<4x1x128xf32> to vector<4x8x128xf32>
    %16 = vector.broadcast %0 : vector<1x8x1xf32> to vector<4x8x128xf32>
    %17 = arith.mulf %15, %16 : vector<4x8x128xf32>
    %18 = vector.broadcast %1 : vector<1x8x1xf32> to vector<4x8x128xf32>
    %19 = arith.addf %17, %18 : vector<4x8x128xf32>
    %20 = math.sin %19 : vector<4x8x128xf32>
    %c0_17 = arith.constant 0 : index
    %c0_18 = arith.constant 0 : index
    %c8 = arith.constant 8 : index
    %c0_19 = arith.constant 0 : index
    %21 = vector.load %arg7[%c0_17, %c0_18, %c8, %c0_19] : memref<1x4x28x128xf32, #tpu.memory_space<vmem>>, vector<1x4x8x128xf32>
    %22 = vector.shape_cast %21 : vector<1x4x8x128xf32> to vector<4x8x128xf32>
    %23 = vector.shape_cast %20 : vector<4x8x128xf32> to vector<1x4x8x128xf32>
    tpu.vector_store %arg7[%c0_17, %c0_18, %c8, %c0_19], %23 {strides = array<i32>} : memref<1x4x28x128xf32, #tpu.memory_space<vmem>>, vector<1x4x8x128xf32>,
    %c0_20 = arith.constant 0 : index
    %c0_21 = arith.constant 0 : index
    %c0_22 = arith.constant 0 : index
    %c0_23 = arith.constant 0 : index
    %24 = vector.load %arg4[%c0_20, %c0_21, %c0_22, %c0_23] : memref<1x4x1x128xf32, #tpu.memory_space<vmem>>, vector<1x4x1x128xf32>
    %25 = vector.shape_cast %24 : vector<1x4x1x128xf32> to vector<4x1x128xf32>
    %26 = vector.broadcast %25 : vector<4x1x128xf32> to vector<4x8x128xf32>
    %27 = vector.broadcast %0 : vector<1x8x1xf32> to vector<4x8x128xf32>
    %28 = arith.mulf %26, %27 : vector<4x8x128xf32>
    %29 = vector.broadcast %1 : vector<1x8x1xf32> to vector<4x8x128xf32>
    %30 = arith.addf %28, %29 : vector<4x8x128xf32>
    %31 = math.sin %30 : vector<4x8x128xf32>
    %c0_24 = arith.constant 0 : index
    %c0_25 = arith.constant 0 : index
    %c16 = arith.constant 16 : index
    %c0_26 = arith.constant 0 : index
    %32 = vector.load %arg7[%c0_24, %c0_25, %c16, %c0_26] : memref<1x4x28x128xf32, #tpu.memory_space<vmem>>, vector<1x4x8x128xf32>
    %33 = vector.shape_cast %32 : vector<1x4x8x128xf32> to vector<4x8x128xf32>
    %34 = vector.shape_cast %31 : vector<4x8x128xf32> to vector<1x4x8x128xf32>
    tpu.vector_store %arg7[%c0_24, %c0_25, %c16, %c0_26], %34 {strides = array<i32>} : memref<1x4x28x128xf32, #tpu.memory_space<vmem>>, vector<1x4x8x128xf32>,
    %cst = arith.constant 0.000000e+00 : f32
    %35 = vector.broadcast %cst : f32 to vector<4x4x128xf32>
    %c0_27 = arith.constant 0 : index
    %c0_28 = arith.constant 0 : index
    %c24 = arith.constant 24 : index
    %c0_29 = arith.constant 0 : index
    %36 = vector.load %arg7[%c0_27, %c0_28, %c24, %c0_29] : memref<1x4x28x128xf32, #tpu.memory_space<vmem>>, vector<1x4x4x128xf32>
    %37 = vector.shape_cast %36 : vector<1x4x4x128xf32> to vector<4x4x128xf32>
    %38 = vector.shape_cast %35 : vector<4x4x128xf32> to vector<1x4x4x128xf32>
    tpu.vector_store %arg7[%c0_27, %c0_28, %c24, %c0_29], %38 {strides = array<i32>} : memref<1x4x28x128xf32, #tpu.memory_space<vmem>>, vector<1x4x4x128xf32>,
    return
  }
  func.func @transform_0(%arg0: i32, %arg1: i32) -> (i32, i32, i32, i32) {
    %c0_i32 = arith.constant 0 : i32
    %c0_i32_0 = arith.constant 0 : i32
    %c0_i32_1 = arith.constant 0 : i32
    return %arg0, %arg1, %c0_i32, %c0_i32_0 : i32, i32, i32, i32
  }
  func.func @transform_1(%arg0: i32, %arg1: i32) -> (i32, i32, i32, i32) {
    %c0_i32 = arith.constant 0 : i32
    %c0_i32_0 = arith.constant 0 : i32
    %c0_i32_1 = arith.constant 0 : i32
    return %arg0, %arg1, %c0_i32, %c0_i32_0 : i32, i32, i32, i32
  }
  func.func @transform_2(%arg0: i32, %arg1: i32) -> (i32, i32, i32, i32) {
    %c0_i32 = arith.constant 0 : i32
    %c0_i32_0 = arith.constant 0 : i32
    %c0_i32_1 = arith.constant 0 : i32
    return %arg0, %arg1, %c0_i32, %c0_i32_0 : i32, i32, i32, i32
  }
  func.func @transform_3(%arg0: i32, %arg1: i32) -> (i32, i32, i32) {
    %c0_i32 = arith.constant 0 : i32
    %c0_i32_0 = arith.constant 0 : i32
    %c0_i32_1 = arith.constant 0 : i32
    %c0_i32_2 = arith.constant 0 : i32
    return %c0_i32, %c0_i32_0, %c0_i32_1 : i32, i32, i32
  }
  func.func @transform_4(%arg0: i32, %arg1: i32) -> (i32, i32, i32) {
    %c0_i32 = arith.constant 0 : i32
    %c0_i32_0 = arith.constant 0 : i32
    %c0_i32_1 = arith.constant 0 : i32
    %c0_i32_2 = arith.constant 0 : i32
    return %c0_i32, %c0_i32_0, %c0_i32_1 : i32, i32, i32
  }
  func.func @transform_5(%arg0: i32, %arg1: i32) -> (i32, i32, i32, i32) {
    %c0_i32 = arith.constant 0 : i32
    %c0_i32_0 = arith.constant 0 : i32
    %c0_i32_1 = arith.constant 0 : i32
    return %arg0, %arg1, %c0_i32, %c0_i32_0 : i32, i32, i32, i32
  }
}

</mosaic_0001>

<llo_original>
// kernel: tpu_custom_call.1
$region0: #{tpu_custom_call.1}
  #allocation0 [shape = 'u32[]', space=smem, size = 0x4, offset = 0x4, fixed_abs, tag = 'smem constant byte address 0x4 - core index']
  #allocation1 [shape = 'u32[144,128]{1,0:T(1,128)}', space=vmem, size = 0x12000, scoped, tag = 'internal scratch']
  %s0 = inlined_call_operand.vmem [shape: f32[2,4,1,128], index: 0, kind: input, shape index: {}]
  %s1 = inlined_call_operand.vmem [shape: f32[2,4,1,128], index: 1, kind: input, shape index: {}]
  %s2 = inlined_call_operand.vmem [shape: f32[2,4,1,128], index: 2, kind: input, shape index: {}]
  %s3 = inlined_call_operand.vmem [shape: f32[1,8,1], index: 3, kind: input, shape index: {}]
  %s4 = inlined_call_operand.vmem [shape: f32[1,8,1], index: 4, kind: input, shape index: {}]
  %s5 = inlined_call_operand.vmem [shape: f32[2,4,28,128], index: 5, kind: output, shape index: {}]
  %s6 = sld [smem:[#allocation0]]
  $region53: #{tpu_custom_call.1} parent=0
    _
  %s8 = ssub.s32 1, %s6
  %s9 = scalar_select 0, %s8, %s6
  loop: start=0, step=1, limit=4
  $region2: #{tpu_custom_call.1} parent=0 // loop_pre_header
    _
  $region3: #{tpu_custom_call.1} parent=0 // loop_header
    %s11 = sphi 0, %s15
    %p12 = scmp.ge.s32.totalorder %s11, 4
    %s18 = sphi 0, %s30
    %s19 = sphi 0, %s26
    %s20 = sphi 0, %s18
    %s21 = sphi 0, %s19
    %s22 = sphi 0, %s20
    %s23 = sphi 0, %s21
    %s35 = sphi 0, %s37
    %s38 = sphi 0, %s35
    %s39 = sphi 0, %s38
    %s55 = sphi 0, %s39
    %s63 = sphi 0, %s65
    %s66 = sphi 0, %s63
    %s67 = sphi 0, %s66
    %s83 = sphi 0, %s67
    %s91 = sphi 0, %s93
    %s94 = sphi 0, %s91
    %s95 = sphi 0, %s94
    %s111 = sphi 0, %s95
    %s115 = sphi 0, %s115
    %s117 = sphi 0, %s115
    %s118 = sphi 0, %s117
    %s132 = sphi 0, %s118
    %s136 = sphi 0, %s136
    %s138 = sphi 0, %s136
    %s139 = sphi 0, %s138
    %s153 = sphi 0, %s139
    %s161 = sphi 0, %s163
    %s164 = sphi 0, %s161
    %s165 = sphi 0, %s164
    %s181 = sphi 0, %s165
  $region4: #{tpu_custom_call.1} parent=0 // loop_header_branch
    %14 = sbr.rel (%p12) target = $region8
  $region5: #{tpu_custom_call.1} parent=0 // loop_body
    %s16 = ssub.s32 %s11, 1
    %s17 = ssub.s32 %s11, 2
    %s24 = sadd.s32 1, %s19
    %p25 = scmp.ge.s32.totalorder %s24, 1
    %s26 = scalar_select %p25, 0, %s24
    %s27 = sadd.s32 1, %s18
    %s28 = scalar_select %p25, %s27, %s18
    %p29 = scmp.ge.s32.totalorder %s28, 2
    %s30 = scalar_select %p29, 0, %s28
    %s31 = ssub.s32 %s18, %s30
    %s32 = ssub.s32 %s19, %s26
    %s33 = sor.u32 %s31, %s32
    %p34 = scmp.eq.s32.totalorder %s33, 0
    %s36 = sadd.s32 %s35, 1
    %s37 = scalar_select %p34, %s35, %s36
    %p40 = pneg %p34
    %p41 = scmp.eq.s32.totalorder %s11, 1
    %p42 = por %p40, %p41
    %p43 = scmp.ne.s32.totalorder %s35, %s38
    %p44 = scmp.eq.s32.totalorder %s11, 0
    %p45 = por %p43, %p44
    %p46 = scmp.ne.s32.totalorder %s35, %s38
    %p47 = scmp.eq.s32.totalorder %s16, 1
    %p48 = por %p46, %p47
    %p49 = scmp.ne.s32.totalorder %s38, %s39
    %p50 = scmp.eq.s32.totalorder %s16, 0
    %p51 = por %p49, %p50
    %p52 = scmp.ne.s32.totalorder %s38, %s39
    %p53 = scmp.eq.s32.totalorder %s17, 1
    %p54 = por %p52, %p53
    %p56 = scmp.ne.s32.totalorder %s39, %s55
    %p57 = scmp.eq.s32.totalorder %s17, 0
    %p58 = por %p56, %p57
    %s59 = ssub.s32 %s18, %s30
    %s60 = ssub.s32 %s19, %s26
    %s61 = sor.u32 %s59, %s60
    %p62 = scmp.eq.s32.totalorder %s61, 0
    %s64 = sadd.s32 %s63, 1
    %s65 = scalar_select %p62, %s63, %s64
    %p68 = pneg %p62
    %p69 = scmp.eq.s32.totalorder %s11, 1
    %p70 = por %p68, %p69
    %p71 = scmp.ne.s32.totalorder %s63, %s66
    %p72 = scmp.eq.s32.totalorder %s11, 0
    %p73 = por %p71, %p72
    %p74 = scmp.ne.s32.totalorder %s63, %s66
    %p75 = scmp.eq.s32.totalorder %s16, 1
    %p76 = por %p74, %p75
    %p77 = scmp.ne.s32.totalorder %s66, %s67
    %p78 = scmp.eq.s32.totalorder %s16, 0
    %p79 = por %p77, %p78
    %p80 = scmp.ne.s32.totalorder %s66, %s67
    %p81 = scmp.eq.s32.totalorder %s17, 1
    %p82 = por %p80, %p81
    %p84 = scmp.ne.s32.totalorder %s67, %s83
    %p85 = scmp.eq.s32.totalorder %s17, 0
    %p86 = por %p84, %p85
    %s87 = ssub.s32 %s18, %s30
    %s88 = ssub.s32 %s19, %s26
    %s89 = sor.u32 %s87, %s88
    %p90 = scmp.eq.s32.totalorder %s89, 0
    %s92 = sadd.s32 %s91, 1
    %s93 = scalar_select %p90, %s91, %s92
    %p96 = pneg %p90
    %p97 = scmp.eq.s32.totalorder %s11, 1
    %p98 = por %p96, %p97
    %p99 = scmp.ne.s32.totalorder %s91, %s94
    %p100 = scmp.eq.s32.totalorder %s11, 0
    %p101 = por %p99, %p100
    %p102 = scmp.ne.s32.totalorder %s91, %s94
    %p103 = scmp.eq.s32.totalorder %s16, 1
    %p104 = por %p102, %p103
    %p105 = scmp.ne.s32.totalorder %s94, %s95
    %p106 = scmp.eq.s32.totalorder %s16, 0
    %p107 = por %p105, %p106
    %p108 = scmp.ne.s32.totalorder %s94, %s95
    %p109 = scmp.eq.s32.totalorder %s17, 1
    %p110 = por %p108, %p109
    %p112 = scmp.ne.s32.totalorder %s95, %s111
    %p113 = scmp.eq.s32.totalorder %s17, 0
    %p114 = por %p112, %p113
    %s116 = sadd.s32 %s115, 1
    %p119 = scmp.eq.s32.totalorder %s11, 1
    %p120 = scmp.ne.s32.totalorder %s115, %s117
    %p121 = scmp.eq.s32.totalorder %s11, 0
    %p122 = por %p120, %p121
    %p123 = scmp.ne.s32.totalorder %s115, %s117
    %p124 = scmp.eq.s32.totalorder %s16, 1
    %p125 = por %p123, %p124
    %p126 = scmp.ne.s32.totalorder %s117, %s118
    %p127 = scmp.eq.s32.totalorder %s16, 0
    %p128 = por %p126, %p127
    %p129 = scmp.ne.s32.totalorder %s117, %s118
    %p130 = scmp.eq.s32.totalorder %s17, 1
    %p131 = por %p129, %p130
    %p133 = scmp.ne.s32.totalorder %s118, %s132
    %p134 = scmp.eq.s32.totalorder %s17, 0
    %p135 = por %p133, %p134
    %s137 = sadd.s32 %s136, 1
    %p140 = scmp.eq.s32.totalorder %s11, 1
    %p141 = scmp.ne.s32.totalorder %s136, %s138
    %p142 = scmp.eq.s32.totalorder %s11, 0
    %p143 = por %p141, %p142
    %p144 = scmp.ne.s32.totalorder %s136, %s138
    %p145 = scmp.eq.s32.totalorder %s16, 1
    %p146 = por %p144, %p145
    %p147 = scmp.ne.s32.totalorder %s138, %s139
    %p148 = scmp.eq.s32.totalorder %s16, 0
    %p149 = por %p147, %p148
    %p150 = scmp.ne.s32.totalorder %s138, %s139
    %p151 = scmp.eq.s32.totalorder %s17, 1
    %p152 = por %p150, %p151
    %p154 = scmp.ne.s32.totalorder %s139, %s153
    %p155 = scmp.eq.s32.totalorder %s17, 0
    %p156 = por %p154, %p155
    %s157 = ssub.s32 %s18, %s30
    %s158 = ssub.s32 %s19, %s26
    %s159 = sor.u32 %s157, %s158
    %p160 = scmp.eq.s32.totalorder %s159, 0
    %s162 = sadd.s32 %s161, 1
    %s163 = scalar_select %p160, %s161, %s162
    %p166 = pneg %p160
    %p167 = scmp.eq.s32.totalorder %s11, 1
    %p168 = por %p166, %p167
    %p169 = scmp.ne.s32.totalorder %s161, %s164
    %p170 = scmp.eq.s32.totalorder %s11, 0
    %p171 = por %p169, %p170
    %p172 = scmp.ne.s32.totalorder %s161, %s164
    %p173 = scmp.eq.s32.totalorder %s16, 1
    %p174 = por %p172, %p173
    %p175 = scmp.ne.s32.totalorder %s164, %s165
    %p176 = scmp.eq.s32.totalorder %s16, 0
    %p177 = por %p175, %p176
    %p178 = scmp.ne.s32.totalorder %s164, %s165
    %p179 = scmp.eq.s32.totalorder %s17, 1
    %p180 = por %p178, %p179
    %p182 = scmp.ne.s32.totalorder %s165, %s181
    %p183 = scmp.eq.s32.totalorder %s17, 0
    %p184 = por %p182, %p183
    %p185 = scmp.le.s32.totalorder 1, %s11
    %p186 = scmp.lt.s32.totalorder %s11, 3
    %p187 = pnand %p185, %p186
    %p188 = pneg %p187
    // Predicated region
    $region9: #{tpu_custom_call.1} parent=5 // pred_check
      _
    $region10: #{tpu_custom_call.1} parent=5 // pred_check_branch
      %190 = sbr.rel (%p187) target = $region12
    $region11: #{tpu_custom_call.1} parent=5 // pred_region
      %s191 = ssub.s32 %s11, 1
      // Predicated region
      $region13: #{tpu_custom_call.1} parent=11 // pred_check
        %p192 = pneg %p128
      $region14: #{tpu_custom_call.1} parent=11 // pred_check_branch
        %194 = sbr.rel (%p192) target = $region16
      $region15: #{tpu_custom_call.1} parent=11 // pred_region
        _
      $region16: #{tpu_custom_call.1} parent=11 // pred_fallthru
        _
      // Predicated region
      $region17: #{tpu_custom_call.1} parent=11 // pred_check
        %p195 = pneg %p149
      $region18: #{tpu_custom_call.1} parent=11 // pred_check_branch
        %197 = sbr.rel (%p195) target = $region20
      $region19: #{tpu_custom_call.1} parent=11 // pred_region
        _
      $region20: #{tpu_custom_call.1} parent=11 // pred_fallthru
        _
    $region12: #{tpu_custom_call.1} parent=5 // pred_fallthru
      _
    %p198 = scmp.lt.s32.totalorder %s11, 2
    // Predicated region
    $region21: #{tpu_custom_call.1} parent=5 // pred_check
      %p199 = pneg %p198
    $region22: #{tpu_custom_call.1} parent=5 // pred_check_branch
      %201 = sbr.rel (%p199) target = $region24
    $region23: #{tpu_custom_call.1} parent=5 // pred_region
      // Predicated region
      $region25: #{tpu_custom_call.1} parent=23 // pred_check
        %p202 = pneg %p45
      $region26: #{tpu_custom_call.1} parent=23 // pred_check_branch
        %204 = sbr.rel (%p202) target = $region28
      $region27: #{tpu_custom_call.1} parent=23 // pred_region
        %s205 = smul.u32 4, %s19
        %p206 = scmp.lt.s32.totalorder %s18, 1
        %s207 = scalar_select %p206, %s18, 1
        %p208 = scmp.lt.s32.totalorder %s205, 3
        %s209 = scalar_select %p208, %s205, 3
        %s210 = smul.addr %s207, 4
        %s211 = sadd.s32 %s209, %s210
        %s212 = scalar_lea.vmem %s0, %s211
        %s213 = smul.u32 4, %s19
      $region28: #{tpu_custom_call.1} parent=23 // pred_fallthru
        _
      // Predicated region
      $region29: #{tpu_custom_call.1} parent=23 // pred_check
        %p214 = pneg %p73
      $region30: #{tpu_custom_call.1} parent=23 // pred_check_branch
        %216 = sbr.rel (%p214) target = $region32
      $region31: #{tpu_custom_call.1} parent=23 // pred_region
        %s217 = smul.u32 4, %s19
        %p218 = scmp.lt.s32.totalorder %s18, 1
        %s219 = scalar_select %p218, %s18, 1
        %p220 = scmp.lt.s32.totalorder %s217, 3
        %s221 = scalar_select %p220, %s217, 3
        %s222 = smul.addr %s219, 4
        %s223 = sadd.s32 %s221, %s222
        %s224 = scalar_lea.vmem %s1, %s223
        %s225 = smul.u32 4, %s19
      $region32: #{tpu_custom_call.1} parent=23 // pred_fallthru
        _
      // Predicated region
      $region33: #{tpu_custom_call.1} parent=23 // pred_check
        %p226 = pneg %p101
      $region34: #{tpu_custom_call.1} parent=23 // pred_check_branch
        %228 = sbr.rel (%p226) target = $region36
      $region35: #{tpu_custom_call.1} parent=23 // pred_region
        %s229 = smul.u32 4, %s19
        %p230 = scmp.lt.s32.totalorder %s18, 1
        %s231 = scalar_select %p230, %s18, 1
        %p232 = scmp.lt.s32.totalorder %s229, 3
        %s233 = scalar_select %p232, %s229, 3
        %s234 = smul.addr %s231, 4
        %s235 = sadd.s32 %s233, %s234
        %s236 = scalar_lea.vmem %s2, %s235
        %s237 = smul.u32 4, %s19
      $region36: #{tpu_custom_call.1} parent=23 // pred_fallthru
        _
    $region24: #{tpu_custom_call.1} parent=5 // pred_fallthru
      _
    %p238 = scmp.le.s32.totalorder 1, %s11
    %p239 = scmp.lt.s32.totalorder %s11, 3
    %p240 = pnand %p238, %p239
    %p241 = pneg %p240
    // Predicated region
    $region37: #{tpu_custom_call.1} parent=5 // pred_check
      _
    $region38: #{tpu_custom_call.1} parent=5 // pred_check_branch
      %243 = sbr.rel (%p240) target = $region40
    $region39: #{tpu_custom_call.1} parent=5 // pred_region
      %s244 = ssub.s32 %s11, 1
      %s245 = smul.u32 4, %s21
      %p246 = scmp.lt.s32.totalorder %s20, 1
      %s247 = scalar_select %p246, %s20, 1
      %p248 = scmp.lt.s32.totalorder %s245, 3
      %s249 = scalar_select %p248, %s245, 3
      %s250 = smul.addr %s247, 4
      %s251 = sadd.s32 %s249, %s250
      %s252 = scalar_lea.vmem %s0, %s251
      %p253 = pneg %p51
      %p254 = pneg %p48
      %s255 = smul.u32 4, %s21
      %p256 = scmp.lt.s32.totalorder %s20, 1
      %s257 = scalar_select %p256, %s20, 1
      %p258 = scmp.lt.s32.totalorder %s255, 3
      %s259 = scalar_select %p258, %s255, 3
      %s260 = smul.addr %s257, 4
      %s261 = sadd.s32 %s259, %s260
      %s262 = scalar_lea.vmem %s1, %s261
      %p263 = pneg %p79
      %p264 = pneg %p76
      %s265 = smul.u32 4, %s21
      %p266 = scmp.lt.s32.totalorder %s20, 1
      %s267 = scalar_select %p266, %s20, 1
      %p268 = scmp.lt.s32.totalorder %s265, 3
      %s269 = scalar_select %p268, %s265, 3
      %s270 = smul.addr %s267, 4
      %s271 = sadd.s32 %s269, %s270
      %s272 = scalar_lea.vmem %s2, %s271
      %p273 = pneg %p107
      %p274 = pneg %p104
      %p275 = pneg %p128
      %p276 = pneg %p125
      %p277 = pneg %p149
      %p278 = pneg %p146
      %p279 = pneg %p177
      %p280 = pneg %p174
      %s281 = smul.u32 4, %s21
      %p282 = scmp.lt.s32.totalorder %s20, 1
      %s283 = scalar_select %p282, %s20, 1
      %p284 = scmp.lt.s32.totalorder %s281, 3
      %s285 = scalar_select %p284, %s281, 3
      %s286 = smul.addr %s285, 4
      %s287 = smul.addr %s283, 16
      %s288 = sadd.s32 %s286, %s287
      %s289 = smul.addr %s288, 8
      %s290 = scalar_lea.vmem %s5, %s289
      %s291 = smul.u32 4, %s21
      %p292 = scmp.lt.s32.totalorder %s20, 1
      %s293 = scalar_select %p292, %s20, 1
      %p294 = scmp.lt.s32.totalorder %s291, 3
      %s295 = scalar_select %p294, %s291, 3
      %s296 = smul.addr %s293, 4
      %s297 = sadd.s32 %s295, %s296
      %s298 = scalar_lea.vmem %s0, %s297
      %s299 = smul.u32 4, %s21
      %s300 = smul.u32 4, %s21
      %p301 = scmp.lt.s32.totalorder %s20, 1
      %s302 = scalar_select %p301, %s20, 1
      %p303 = scmp.lt.s32.totalorder %s300, 3
      %s304 = scalar_select %p303, %s300, 3
      %s305 = smul.addr %s302, 4
      %s306 = sadd.s32 %s304, %s305
      %s307 = scalar_lea.vmem %s1, %s306
      %s308 = smul.u32 4, %s21
      %s309 = smul.u32 4, %s21
      %p310 = scmp.lt.s32.totalorder %s20, 1
      %s311 = scalar_select %p310, %s20, 1
      %p312 = scmp.lt.s32.totalorder %s309, 3
      %s313 = scalar_select %p312, %s309, 3
      %s314 = smul.addr %s311, 4
      %s315 = sadd.s32 %s313, %s314
      %s316 = scalar_lea.vmem %s2, %s315
      %s317 = smul.u32 4, %s21
      %s318 = smul.u32 4, %s21
      %p319 = scmp.lt.s32.totalorder %s20, 1
      %s320 = scalar_select %p319, %s20, 1
      %p321 = scmp.lt.s32.totalorder %s318, 3
      %s322 = scalar_select %p321, %s318, 3
      %s323 = smul.addr %s322, 4
      %s324 = smul.addr %s320, 16
      %s325 = sadd.s32 %s323, %s324
      %s326 = smul.addr %s325, 8
      %s327 = scalar_lea.vmem %s5, %s326
      %s328 = smul.u32 4, %s21
      %v329 = vld [vmem:[%s3] sm:$0xff]
      %v330 = vld [vmem:[%s4] sm:$0xff]
      %v331 = vld [vmem:[%s298] sm:$0x1]
      %v332 = vld [vmem:[%s298 + $0x1] sm:$0x1]
      %v333 = vld [vmem:[%s298 + $0x2] sm:$0x1]
      %v334 = vld [vmem:[%s298 + $0x3] sm:$0x1]
      %v339 = vlaneseq
      %v340 = vshrl.u32 %v339, 7
      %v341 = vsub.s32 0, %v340
      %v342 = vrot.slane %v331, %v341
      %v343 = vlaneseq
      %v344 = vshrl.u32 %v343, 7
      %v345 = vsub.s32 0, %v344
      %v346 = vrot.slane %v332, %v345
      %v347 = vlaneseq
      %v348 = vshrl.u32 %v347, 7
      %v349 = vsub.s32 0, %v348
      %v350 = vrot.slane %v333, %v349
      %v351 = vlaneseq
      %v352 = vshrl.u32 %v351, 7
      %v353 = vsub.s32 0, %v352
      %v354 = vrot.slane %v334, %v353
      %360 = vset.pattern.permute.xlu0 0
      %361 = vperm.xlu0 %360, %v329
      %v362 = vpop.permute.xlu0 %361
      %v364 = vmul.f32 %v342, %v362
      %v365 = vmul.f32 %v346, %v362
      %v366 = vmul.f32 %v350, %v362
      %v367 = vmul.f32 %v354, %v362
      %369 = vset.pattern.permute.xlu0 0
      %370 = vperm.xlu0 %369, %v330
      %v371 = vpop.permute.xlu0 %370
      %v373 = vadd.f32 %v364, %v371
      %v374 = vadd.f32 %v365, %v371
      %v375 = vadd.f32 %v366, %v371
      %v376 = vadd.f32 %v367, %v371
      %v377 = vand.u32 2147483647, %v373
      %vm378 = vcmp.le.f32.partialorder %v377, 0.7853982
      %vm379 = vcmp.lt.s32.totalorder %v373, 0
      %v380 = vand.u32 %v373, 2139095040
      %v381 = vshrl.u32 %v380, 23
      %v382 = vsub.s32 %v381, 127
      %v383 = vand.u32 2147483647, %v373
      %v384 = vand.u32 %v383, 8388607
      %v385 = vor.u32 %v384, 8388608
      %v386 = vsub.s32 0, %v385
      %v387 = vadd.s32 %v382, 1
      %vm388 = vcmp.gt.s32.totalorder %v387, 0
      %v389 = vsel %vm388, %v387, 0
      %v390 = vshrl.u32 %v389, 5
      %v391 = vand.u32 %v389, 31
      %v392 = vsub.s32 32, %v391
      %v393 = vshrl.u32 683565275, %v392
      %v394 = vshll.u32 683565275, %v391
      %v395 = vshrl.u32 2475754826, %v392
      %v396 = vor.u32 %v394, %v395
      %v397 = vshll.u32 2475754826, %v391
      %v398 = vshrl.u32 2131351028, %v392
      %v399 = vor.u32 %v397, %v398
      %v400 = vshll.u32 2131351028, %v391
      %v401 = vshrl.u32 2102212464, %v392
      %v402 = vor.u32 %v400, %v401
      %v403 = vshll.u32 2102212464, %v391
      %v404 = vshrl.u32 920167782, %v392
      %v405 = vor.u32 %v403, %v404
      %v406 = vshll.u32 920167782, %v391
      %v407 = vshrl.u32 1326507024, %v392
      %v408 = vor.u32 %v406, %v407
      %vm409 = vcmp.lt.s32.totalorder %v390, 1
      %vm410 = vcmp.lt.s32.totalorder %v390, 2
      %vm411 = vcmp.lt.s32.totalorder %v390, 3
      %vm412 = vcmp.lt.s32.totalorder %v390, 4
      %v413 = vsel %vm409, %v393, %v396
      %v414 = vsel %vm412, %v402, 2102212464
      %v415 = vsel %vm411, %v399, %v414
      %v416 = vsel %vm410, %v413, %v415
      %v417 = vsel %vm409, %v396, %v399
      %v418 = vsel %vm412, %v405, 920167782
      %v419 = vsel %vm411, %v402, %v418
      %v420 = vsel %vm410, %v417, %v419
      %v421 = vsel %vm409, %v399, %v402
      %v422 = vsel %vm412, %v408, 1326507024
      %v423 = vsel %vm411, %v405, %v422
      %v424 = vsel %vm410, %v421, %v423
      %v425 = vshll.u32 %v385, 8
      %v426 = vmul.u32.u64.compose %v425, %v424
      %v427 = vextract.low.u32 %v426
      %v428 = vextract.high.u32 %v426
      %v429 = vmul.u32.u64.compose %v425, %v420
      %v430 = vextract.low.u32 %v429
      %v431 = vextract.high.u32 %v429
      %v432 = vmul.u32 %v425, %v416
      %v433 = vadd.s32 %v428, %v430
      %vm434 = vc.u32 %v428, %v430
      %v435 = vadd.s32 %v431, 1
      %v436 = vsel %vm434, %v435, %v431
      %v437 = vadd.s32 %v432, %v436
      %v438 = vadd.s32 %v437, 536870912
      %v439 = vshrl.u32 %v438, 30
      %v440 = vshll.u32 %v439, 30
      %v441 = vsub.s32 %v437, %v440
      %vm442 = vcmp.lt.s32.totalorder %v441, 0
      %v443 = vsub.s32 0, %v441
      %v444 = vsel %vm442, %v443, %v441
      %v445 = vclz %v444
      %v446 = vsub.s32 %v445, 2
      %vm447 = vcmp.gt.s32.totalorder 0, %v446
      %v448 = vsel %vm447, 0, %v446
      %v449 = vsub.s32 32, %v448
      %v450 = vshll.u32 %v441, %v448
      %v451 = vshrl.u32 %v433, %v449
      %v452 = vor.u32 %v450, %v451
      %v453 = vsub.s32 4294967266, %v448
      %v454 = vadd.s32 %v453, 127
      %v455 = vshll.u32 %v454, 23
      %v456 = vor.u32 4788187, %v455
      %v457 = vand.u32 2147483647, %v456
      %v459 = vcvt.s32.f32 %v452
      %v460 = vmul.f32 %v459, %v457
      %v461 = vxor.u32 %v460, 2147483648
      %v462 = vsel %vm379, %v461, %v460
      %v463 = vsub.s32 4, %v439
      %v464 = vsel %vm379, %v463, %v439
      %v465 = vsel %vm378, %v373, %v462
      %v466 = vsel %vm378, 0, %v464
      %v467 = vcosq.f32.pop %v465
      %v468 = vsinq.f32.pop %v465
      %vm469 = vweird.f32 %v373
      %v470 = vadd.s32 %v466, 3
      %v471 = vand.u32 %v470, 3
      %vm472 = vcmp.lt.s32.totalorder %v471, 2
      %vm473 = vcmp.eq.s32.totalorder %v471, 0
      %v474 = vxor.u32 %v468, 2147483648
      %v475 = vsel %vm473, %v467, %v474
      %vm476 = vcmp.eq.s32.totalorder %v471, 2
      %v477 = vxor.u32 %v467, 2147483648
      %v478 = vsel %vm476, %v477, %v468
      %v479 = vsel %vm472, %v475, %v478
      %v480 = vsel %vm469, nan, %v479
      %v481 = vand.u32 2147483647, %v374
      %vm482 = vcmp.le.f32.partialorder %v481, 0.7853982
      %vm483 = vcmp.lt.s32.totalorder %v374, 0
      %v484 = vand.u32 %v374, 2139095040
      %v485 = vshrl.u32 %v484, 23
      %v486 = vsub.s32 %v485, 127
      %v487 = vand.u32 2147483647, %v374
      %v488 = vand.u32 %v487, 8388607
      %v489 = vor.u32 %v488, 8388608
      %v490 = vsub.s32 0, %v489
      %v491 = vadd.s32 %v486, 1
      %vm492 = vcmp.gt.s32.totalorder %v491, 0
      %v493 = vsel %vm492, %v491, 0
      %v494 = vshrl.u32 %v493, 5
      %v495 = vand.u32 %v493, 31
      %v496 = vsub.s32 32, %v495
      %v497 = vshrl.u32 683565275, %v496
      %v498 = vshll.u32 683565275, %v495
      %v499 = vshrl.u32 2475754826, %v496
      %v500 = vor.u32 %v498, %v499
      %v501 = vshll.u32 2475754826, %v495
      %v502 = vshrl.u32 2131351028, %v496
      %v503 = vor.u32 %v501, %v502
      %v504 = vshll.u32 2131351028, %v495
      %v505 = vshrl.u32 2102212464, %v496
      %v506 = vor.u32 %v504, %v505
      %v507 = vshll.u32 2102212464, %v495
      %v508 = vshrl.u32 920167782, %v496
      %v509 = vor.u32 %v507, %v508
      %v510 = vshll.u32 920167782, %v495
      %v511 = vshrl.u32 1326507024, %v496
      %v512 = vor.u32 %v510, %v511
      %vm513 = vcmp.lt.s32.totalorder %v494, 1
      %vm514 = vcmp.lt.s32.totalorder %v494, 2
      %vm515 = vcmp.lt.s32.totalorder %v494, 3
      %vm516 = vcmp.lt.s32.totalorder %v494, 4
      %v517 = vsel %vm513, %v497, %v500
      %v518 = vsel %vm516, %v506, 2102212464
      %v519 = vsel %vm515, %v503, %v518
      %v520 = vsel %vm514, %v517, %v519
      %v521 = vsel %vm513, %v500, %v503
      %v522 = vsel %vm516, %v509, 920167782
      %v523 = vsel %vm515, %v506, %v522
      %v524 = vsel %vm514, %v521, %v523
      %v525 = vsel %vm513, %v503, %v506
      %v526 = vsel %vm516, %v512, 1326507024
      %v527 = vsel %vm515, %v509, %v526
      %v528 = vsel %vm514, %v525, %v527
      %v529 = vshll.u32 %v489, 8
      %v530 = vmul.u32.u64.compose %v529, %v528
      %v531 = vextract.low.u32 %v530
      %v532 = vextract.high.u32 %v530
      %v533 = vmul.u32.u64.compose %v529, %v524
      %v534 = vextract.low.u32 %v533
      %v535 = vextract.high.u32 %v533
      %v536 = vmul.u32 %v529, %v520
      %v537 = vadd.s32 %v532, %v534
      %vm538 = vc.u32 %v532, %v534
      %v539 = vadd.s32 %v535, 1
      %v540 = vsel %vm538, %v539, %v535
      %v541 = vadd.s32 %v536, %v540
      %v542 = vadd.s32 %v541, 536870912
      %v543 = vshrl.u32 %v542, 30
      %v544 = vshll.u32 %v543, 30
      %v545 = vsub.s32 %v541, %v544
      %vm546 = vcmp.lt.s32.totalorder %v545, 0
      %v547 = vsub.s32 0, %v545
      %v548 = vsel %vm546, %v547, %v545
      %v549 = vclz %v548
      %v550 = vsub.s32 %v549, 2
      %vm551 = vcmp.gt.s32.totalorder 0, %v550
      %v552 = vsel %vm551, 0, %v550
      %v553 = vsub.s32 32, %v552
      %v554 = vshll.u32 %v545, %v552
      %v555 = vshrl.u32 %v537, %v553
      %v556 = vor.u32 %v554, %v555
      %v557 = vsub.s32 4294967266, %v552
      %v558 = vadd.s32 %v557, 127
      %v559 = vshll.u32 %v558, 23
      %v560 = vor.u32 4788187, %v559
      %v561 = vand.u32 2147483647, %v560
      %v563 = vcvt.s32.f32 %v556
      %v564 = vmul.f32 %v563, %v561
      %v565 = vxor.u32 %v564, 2147483648
      %v566 = vsel %vm483, %v565, %v564
      %v567 = vsub.s32 4, %v543
      %v568 = vsel %vm483, %v567, %v543
      %v569 = vsel %vm482, %v374, %v566
      %v570 = vsel %vm482, 0, %v568
      %v571 = vcosq.f32.pop %v569
      %v572 = vsinq.f32.pop %v569
      %vm573 = vweird.f32 %v374
      %v574 = vadd.s32 %v570, 3
      %v575 = vand.u32 %v574, 3
      %vm576 = vcmp.lt.s32.totalorder %v575, 2
      %vm577 = vcmp.eq.s32.totalorder %v575, 0
      %v578 = vxor.u32 %v572, 2147483648
      %v579 = vsel %vm577, %v571, %v578
      %vm580 = vcmp.eq.s32.totalorder %v575, 2
      %v581 = vxor.u32 %v571, 2147483648
      %v582 = vsel %vm580, %v581, %v572
      %v583 = vsel %vm576, %v579, %v582
      %v584 = vsel %vm573, nan, %v583
      %v585 = vand.u32 2147483647, %v375
      %vm586 = vcmp.le.f32.partialorder %v585, 0.7853982
      %vm587 = vcmp.lt.s32.totalorder %v375, 0
      %v588 = vand.u32 %v375, 2139095040
      %v589 = vshrl.u32 %v588, 23
      %v590 = vsub.s32 %v589, 127
      %v591 = vand.u32 2147483647, %v375
      %v592 = vand.u32 %v591, 8388607
      %v593 = vor.u32 %v592, 8388608
      %v594 = vsub.s32 0, %v593
      %v595 = vadd.s32 %v590, 1
      %vm596 = vcmp.gt.s32.totalorder %v595, 0
      %v597 = vsel %vm596, %v595, 0
      %v598 = vshrl.u32 %v597, 5
      %v599 = vand.u32 %v597, 31
      %v600 = vsub.s32 32, %v599
      %v601 = vshrl.u32 683565275, %v600
      %v602 = vshll.u32 683565275, %v599
      %v603 = vshrl.u32 2475754826, %v600
      %v604 = vor.u32 %v602, %v603
      %v605 = vshll.u32 2475754826, %v599
      %v606 = vshrl.u32 2131351028, %v600
      %v607 = vor.u32 %v605, %v606
      %v608 = vshll.u32 2131351028, %v599
      %v609 = vshrl.u32 2102212464, %v600
      %v610 = vor.u32 %v608, %v609
      %v611 = vshll.u32 2102212464, %v599
      %v612 = vshrl.u32 920167782, %v600
      %v613 = vor.u32 %v611, %v612
      %v614 = vshll.u32 920167782, %v599
      %v615 = vshrl.u32 1326507024, %v600
      %v616 = vor.u32 %v614, %v615
      %vm617 = vcmp.lt.s32.totalorder %v598, 1
      %vm618 = vcmp.lt.s32.totalorder %v598, 2
      %vm619 = vcmp.lt.s32.totalorder %v598, 3
      %vm620 = vcmp.lt.s32.totalorder %v598, 4
      %v621 = vsel %vm617, %v601, %v604
      %v622 = vsel %vm620, %v610, 2102212464
      %v623 = vsel %vm619, %v607, %v622
      %v624 = vsel %vm618, %v621, %v623
      %v625 = vsel %vm617, %v604, %v607
      %v626 = vsel %vm620, %v613, 920167782
      %v627 = vsel %vm619, %v610, %v626
      %v628 = vsel %vm618, %v625, %v627
      %v629 = vsel %vm617, %v607, %v610
      %v630 = vsel %vm620, %v616, 1326507024
      %v631 = vsel %vm619, %v613, %v630
      %v632 = vsel %vm618, %v629, %v631
      %v633 = vshll.u32 %v593, 8
      %v634 = vmul.u32.u64.compose %v633, %v632
      %v635 = vextract.low.u32 %v634
      %v636 = vextract.high.u32 %v634
      %v637 = vmul.u32.u64.compose %v633, %v628
      %v638 = vextract.low.u32 %v637
      %v639 = vextract.high.u32 %v637
      %v640 = vmul.u32 %v633, %v624
      %v641 = vadd.s32 %v636, %v638
      %vm642 = vc.u32 %v636, %v638
      %v643 = vadd.s32 %v639, 1
      %v644 = vsel %vm642, %v643, %v639
      %v645 = vadd.s32 %v640, %v644
      %v646 = vadd.s32 %v645, 536870912
      %v647 = vshrl.u32 %v646, 30
      %v648 = vshll.u32 %v647, 30
      %v649 = vsub.s32 %v645, %v648
      %vm650 = vcmp.lt.s32.totalorder %v649, 0
      %v651 = vsub.s32 0, %v649
      %v652 = vsel %vm650, %v651, %v649
      %v653 = vclz %v652
      %v654 = vsub.s32 %v653, 2
      %vm655 = vcmp.gt.s32.totalorder 0, %v654
      %v656 = vsel %vm655, 0, %v654
      %v657 = vsub.s32 32, %v656
      %v658 = vshll.u32 %v649, %v656
      %v659 = vshrl.u32 %v641, %v657
      %v660 = vor.u32 %v658, %v659
      %v661 = vsub.s32 4294967266, %v656
      %v662 = vadd.s32 %v661, 127
      %v663 = vshll.u32 %v662, 23
      %v664 = vor.u32 4788187, %v663
      %v665 = vand.u32 2147483647, %v664
      %v667 = vcvt.s32.f32 %v660
      %v668 = vmul.f32 %v667, %v665
      %v669 = vxor.u32 %v668, 2147483648
      %v670 = vsel %vm587, %v669, %v668
      %v671 = vsub.s32 4, %v647
      %v672 = vsel %vm587, %v671, %v647
      %v673 = vsel %vm586, %v375, %v670
      %v674 = vsel %vm586, 0, %v672
      %v675 = vcosq.f32.pop %v673
      %v676 = vsinq.f32.pop %v673
      %vm677 = vweird.f32 %v375
      %v678 = vadd.s32 %v674, 3
      %v679 = vand.u32 %v678, 3
      %vm680 = vcmp.lt.s32.totalorder %v679, 2
      %vm681 = vcmp.eq.s32.totalorder %v679, 0
      %v682 = vxor.u32 %v676, 2147483648
      %v683 = vsel %vm681, %v675, %v682
      %vm684 = vcmp.eq.s32.totalorder %v679, 2
      %v685 = vxor.u32 %v675, 2147483648
      %v686 = vsel %vm684, %v685, %v676
      %v687 = vsel %vm680, %v683, %v686
      %v688 = vsel %vm677, nan, %v687
      %v689 = vand.u32 2147483647, %v376
      %vm690 = vcmp.le.f32.partialorder %v689, 0.7853982
      %vm691 = vcmp.lt.s32.totalorder %v376, 0
      %v692 = vand.u32 %v376, 2139095040
      %v693 = vshrl.u32 %v692, 23
      %v694 = vsub.s32 %v693, 127
      %v695 = vand.u32 2147483647, %v376
      %v696 = vand.u32 %v695, 8388607
      %v697 = vor.u32 %v696, 8388608
      %v698 = vsub.s32 0, %v697
      %v699 = vadd.s32 %v694, 1
      %vm700 = vcmp.gt.s32.totalorder %v699, 0
      %v701 = vsel %vm700, %v699, 0
      %v702 = vshrl.u32 %v701, 5
      %v703 = vand.u32 %v701, 31
      %v704 = vsub.s32 32, %v703
      %v705 = vshrl.u32 683565275, %v704
      %v706 = vshll.u32 683565275, %v703
      %v707 = vshrl.u32 2475754826, %v704
      %v708 = vor.u32 %v706, %v707
      %v709 = vshll.u32 2475754826, %v703
      %v710 = vshrl.u32 2131351028, %v704
      %v711 = vor.u32 %v709, %v710
      %v712 = vshll.u32 2131351028, %v703
      %v713 = vshrl.u32 2102212464, %v704
      %v714 = vor.u32 %v712, %v713
      %v715 = vshll.u32 2102212464, %v703
      %v716 = vshrl.u32 920167782, %v704
      %v717 = vor.u32 %v715, %v716
      %v718 = vshll.u32 920167782, %v703
      %v719 = vshrl.u32 1326507024, %v704
      %v720 = vor.u32 %v718, %v719
      %vm721 = vcmp.lt.s32.totalorder %v702, 1
      %vm722 = vcmp.lt.s32.totalorder %v702, 2
      %vm723 = vcmp.lt.s32.totalorder %v702, 3
      %vm724 = vcmp.lt.s32.totalorder %v702, 4
      %v725 = vsel %vm721, %v705, %v708
      %v726 = vsel %vm724, %v714, 2102212464
      %v727 = vsel %vm723, %v711, %v726
      %v728 = vsel %vm722, %v725, %v727
      %v729 = vsel %vm721, %v708, %v711
      %v730 = vsel %vm724, %v717, 920167782
      %v731 = vsel %vm723, %v714, %v730
      %v732 = vsel %vm722, %v729, %v731
      %v733 = vsel %vm721, %v711, %v714
      %v734 = vsel %vm724, %v720, 1326507024
      %v735 = vsel %vm723, %v717, %v734
      %v736 = vsel %vm722, %v733, %v735
      %v737 = vshll.u32 %v697, 8
      %v738 = vmul.u32.u64.compose %v737, %v736
      %v739 = vextract.low.u32 %v738
      %v740 = vextract.high.u32 %v738
      %v741 = vmul.u32.u64.compose %v737, %v732
      %v742 = vextract.low.u32 %v741
      %v743 = vextract.high.u32 %v741
      %v744 = vmul.u32 %v737, %v728
      %v745 = vadd.s32 %v740, %v742
      %vm746 = vc.u32 %v740, %v742
      %v747 = vadd.s32 %v743, 1
      %v748 = vsel %vm746, %v747, %v743
      %v749 = vadd.s32 %v744, %v748
      %v750 = vadd.s32 %v749, 536870912
      %v751 = vshrl.u32 %v750, 30
      %v752 = vshll.u32 %v751, 30
      %v753 = vsub.s32 %v749, %v752
      %vm754 = vcmp.lt.s32.totalorder %v753, 0
      %v755 = vsub.s32 0, %v753
      %v756 = vsel %vm754, %v755, %v753
      %v757 = vclz %v756
      %v758 = vsub.s32 %v757, 2
      %vm759 = vcmp.gt.s32.totalorder 0, %v758
      %v760 = vsel %vm759, 0, %v758
      %v761 = vsub.s32 32, %v760
      %v762 = vshll.u32 %v753, %v760
      %v763 = vshrl.u32 %v745, %v761
      %v764 = vor.u32 %v762, %v763
      %v765 = vsub.s32 4294967266, %v760
      %v766 = vadd.s32 %v765, 127
      %v767 = vshll.u32 %v766, 23
      %v768 = vor.u32 4788187, %v767
      %v769 = vand.u32 2147483647, %v768
      %v771 = vcvt.s32.f32 %v764
      %v772 = vmul.f32 %v771, %v769
      %v773 = vxor.u32 %v772, 2147483648
      %v774 = vsel %vm691, %v773, %v772
      %v775 = vsub.s32 4, %v751
      %v776 = vsel %vm691, %v775, %v751
      %v777 = vsel %vm690, %v376, %v774
      %v778 = vsel %vm690, 0, %v776
      %v779 = vcosq.f32.pop %v777
      %v780 = vsinq.f32.pop %v777
      %vm781 = vweird.f32 %v376
      %v782 = vadd.s32 %v778, 3
      %v783 = vand.u32 %v782, 3
      %vm784 = vcmp.lt.s32.totalorder %v783, 2
      %vm785 = vcmp.eq.s32.totalorder %v783, 0
      %v786 = vxor.u32 %v780, 2147483648
      %v787 = vsel %vm785, %v779, %v786
      %vm788 = vcmp.eq.s32.totalorder %v783, 2
      %v789 = vxor.u32 %v779, 2147483648
      %v790 = vsel %vm788, %v789, %v780
      %v791 = vsel %vm784, %v787, %v790
      %v792 = vsel %vm781, nan, %v791
      %793 = vst [vmem:[%s327] sm:$0xff] %v480
      %794 = vst [vmem:[%s327 + $0x20] sm:$0xff] %v584
      %795 = vst [vmem:[%s327 + $0x40] sm:$0xff] %v688
      %796 = vst [vmem:[%s327 + $0x60] sm:$0xff] %v792
      %v797 = vld [vmem:[%s307] sm:$0x1]
      %v798 = vld [vmem:[%s307 + $0x1] sm:$0x1]
      %v799 = vld [vmem:[%s307 + $0x2] sm:$0x1]
      %v800 = vld [vmem:[%s307 + $0x3] sm:$0x1]
      %v805 = vlaneseq
      %v806 = vshrl.u32 %v805, 7
      %v807 = vsub.s32 0, %v806
      %v808 = vrot.slane %v797, %v807
      %v809 = vlaneseq
      %v810 = vshrl.u32 %v809, 7
      %v811 = vsub.s32 0, %v810
      %v812 = vrot.slane %v798, %v811
      %v813 = vlaneseq
      %v814 = vshrl.u32 %v813, 7
      %v815 = vsub.s32 0, %v814
      %v816 = vrot.slane %v799, %v815
      %v817 = vlaneseq
      %v818 = vshrl.u32 %v817, 7
      %v819 = vsub.s32 0, %v818
      %v820 = vrot.slane %v800, %v819
      %v825 = vmul.f32 %v808, %v362
      %v826 = vmul.f32 %v812, %v362
      %v827 = vmul.f32 %v816, %v362
      %v828 = vmul.f32 %v820, %v362
      %v829 = vadd.f32 %v825, %v371
      %v830 = vadd.f32 %v826, %v371
      %v831 = vadd.f32 %v827, %v371
      %v832 = vadd.f32 %v828, %v371
      %v833 = vand.u32 2147483647, %v829
      %vm834 = vcmp.le.f32.partialorder %v833, 0.7853982
      %vm835 = vcmp.lt.s32.totalorder %v829, 0
      %v836 = vand.u32 %v829, 2139095040
      %v837 = vshrl.u32 %v836, 23
      %v838 = vsub.s32 %v837, 127
      %v839 = vand.u32 2147483647, %v829
      %v840 = vand.u32 %v839, 8388607
      %v841 = vor.u32 %v840, 8388608
      %v842 = vsub.s32 0, %v841
      %v843 = vadd.s32 %v838, 1
      %vm844 = vcmp.gt.s32.totalorder %v843, 0
      %v845 = vsel %vm844, %v843, 0
      %v846 = vshrl.u32 %v845, 5
      %v847 = vand.u32 %v845, 31
      %v848 = vsub.s32 32, %v847
      %v849 = vshrl.u32 683565275, %v848
      %v850 = vshll.u32 683565275, %v847
      %v851 = vshrl.u32 2475754826, %v848
      %v852 = vor.u32 %v850, %v851
      %v853 = vshll.u32 2475754826, %v847
      %v854 = vshrl.u32 2131351028, %v848
      %v855 = vor.u32 %v853, %v854
      %v856 = vshll.u32 2131351028, %v847
      %v857 = vshrl.u32 2102212464, %v848
      %v858 = vor.u32 %v856, %v857
      %v859 = vshll.u32 2102212464, %v847
      %v860 = vshrl.u32 920167782, %v848
      %v861 = vor.u32 %v859, %v860
      %v862 = vshll.u32 920167782, %v847
      %v863 = vshrl.u32 1326507024, %v848
      %v864 = vor.u32 %v862, %v863
      %vm865 = vcmp.lt.s32.totalorder %v846, 1
      %vm866 = vcmp.lt.s32.totalorder %v846, 2
      %vm867 = vcmp.lt.s32.totalorder %v846, 3
      %vm868 = vcmp.lt.s32.totalorder %v846, 4
      %v869 = vsel %vm865, %v849, %v852
      %v870 = vsel %vm868, %v858, 2102212464
      %v871 = vsel %vm867, %v855, %v870
      %v872 = vsel %vm866, %v869, %v871
      %v873 = vsel %vm865, %v852, %v855
      %v874 = vsel %vm868, %v861, 920167782
      %v875 = vsel %vm867, %v858, %v874
      %v876 = vsel %vm866, %v873, %v875
      %v877 = vsel %vm865, %v855, %v858
      %v878 = vsel %vm868, %v864, 1326507024
      %v879 = vsel %vm867, %v861, %v878
      %v880 = vsel %vm866, %v877, %v879
      %v881 = vshll.u32 %v841, 8
      %v882 = vmul.u32.u64.compose %v881, %v880
      %v883 = vextract.low.u32 %v882
      %v884 = vextract.high.u32 %v882
      %v885 = vmul.u32.u64.compose %v881, %v876
      %v886 = vextract.low.u32 %v885
      %v887 = vextract.high.u32 %v885
      %v888 = vmul.u32 %v881, %v872
      %v889 = vadd.s32 %v884, %v886
      %vm890 = vc.u32 %v884, %v886
      %v891 = vadd.s32 %v887, 1
      %v892 = vsel %vm890, %v891, %v887
      %v893 = vadd.s32 %v888, %v892
      %v894 = vadd.s32 %v893, 536870912
      %v895 = vshrl.u32 %v894, 30
      %v896 = vshll.u32 %v895, 30
      %v897 = vsub.s32 %v893, %v896
      %vm898 = vcmp.lt.s32.totalorder %v897, 0
      %v899 = vsub.s32 0, %v897
      %v900 = vsel %vm898, %v899, %v897
      %v901 = vclz %v900
      %v902 = vsub.s32 %v901, 2
      %vm903 = vcmp.gt.s32.totalorder 0, %v902
      %v904 = vsel %vm903, 0, %v902
      %v905 = vsub.s32 32, %v904
      %v906 = vshll.u32 %v897, %v904
      %v907 = vshrl.u32 %v889, %v905
      %v908 = vor.u32 %v906, %v907
      %v909 = vsub.s32 4294967266, %v904
      %v910 = vadd.s32 %v909, 127
      %v911 = vshll.u32 %v910, 23
      %v912 = vor.u32 4788187, %v911
      %v913 = vand.u32 2147483647, %v912
      %v915 = vcvt.s32.f32 %v908
      %v916 = vmul.f32 %v915, %v913
      %v917 = vxor.u32 %v916, 2147483648
      %v918 = vsel %vm835, %v917, %v916
      %v919 = vsub.s32 4, %v895
      %v920 = vsel %vm835, %v919, %v895
      %v921 = vsel %vm834, %v829, %v918
      %v922 = vsel %vm834, 0, %v920
      %v923 = vcosq.f32.pop %v921
      %v924 = vsinq.f32.pop %v921
      %vm925 = vweird.f32 %v829
      %v926 = vadd.s32 %v922, 3
      %v927 = vand.u32 %v926, 3
      %vm928 = vcmp.lt.s32.totalorder %v927, 2
      %vm929 = vcmp.eq.s32.totalorder %v927, 0
      %v930 = vxor.u32 %v924, 2147483648
      %v931 = vsel %vm929, %v923, %v930
      %vm932 = vcmp.eq.s32.totalorder %v927, 2
      %v933 = vxor.u32 %v923, 2147483648
      %v934 = vsel %vm932, %v933, %v924
      %v935 = vsel %vm928, %v931, %v934
      %v936 = vsel %vm925, nan, %v935
      %v937 = vand.u32 2147483647, %v830
      %vm938 = vcmp.le.f32.partialorder %v937, 0.7853982
      %vm939 = vcmp.lt.s32.totalorder %v830, 0
      %v940 = vand.u32 %v830, 2139095040
      %v941 = vshrl.u32 %v940, 23
      %v942 = vsub.s32 %v941, 127
      %v943 = vand.u32 2147483647, %v830
      %v944 = vand.u32 %v943, 8388607
      %v945 = vor.u32 %v944, 8388608
      %v946 = vsub.s32 0, %v945
      %v947 = vadd.s32 %v942, 1
      %vm948 = vcmp.gt.s32.totalorder %v947, 0
      %v949 = vsel %vm948, %v947, 0
      %v950 = vshrl.u32 %v949, 5
      %v951 = vand.u32 %v949, 31
      %v952 = vsub.s32 32, %v951
      %v953 = vshrl.u32 683565275, %v952
      %v954 = vshll.u32 683565275, %v951
      %v955 = vshrl.u32 2475754826, %v952
      %v956 = vor.u32 %v954, %v955
      %v957 = vshll.u32 2475754826, %v951
      %v958 = vshrl.u32 2131351028, %v952
      %v959 = vor.u32 %v957, %v958
      %v960 = vshll.u32 2131351028, %v951
      %v961 = vshrl.u32 2102212464, %v952
      %v962 = vor.u32 %v960, %v961
      %v963 = vshll.u32 2102212464, %v951
      %v964 = vshrl.u32 920167782, %v952
      %v965 = vor.u32 %v963, %v964
      %v966 = vshll.u32 920167782, %v951
      %v967 = vshrl.u32 1326507024, %v952
      %v968 = vor.u32 %v966, %v967
      %vm969 = vcmp.lt.s32.totalorder %v950, 1
      %vm970 = vcmp.lt.s32.totalorder %v950, 2
      %vm971 = vcmp.lt.s32.totalorder %v950, 3
      %vm972 = vcmp.lt.s32.totalorder %v950, 4
      %v973 = vsel %vm969, %v953, %v956
      %v974 = vsel %vm972, %v962, 2102212464
      %v975 = vsel %vm971, %v959, %v974
      %v976 = vsel %vm970, %v973, %v975
      %v977 = vsel %vm969, %v956, %v959
      %v978 = vsel %vm972, %v965, 920167782
      %v979 = vsel %vm971, %v962, %v978
      %v980 = vsel %vm970, %v977, %v979
      %v981 = vsel %vm969, %v959, %v962
      %v982 = vsel %vm972, %v968, 1326507024
      %v983 = vsel %vm971, %v965, %v982
      %v984 = vsel %vm970, %v981, %v983
      %v985 = vshll.u32 %v945, 8
      %v986 = vmul.u32.u64.compose %v985, %v984
      %v987 = vextract.low.u32 %v986
      %v988 = vextract.high.u32 %v986
      %v989 = vmul.u32.u64.compose %v985, %v980
      %v990 = vextract.low.u32 %v989
      %v991 = vextract.high.u32 %v989
      %v992 = vmul.u32 %v985, %v976
      %v993 = vadd.s32 %v988, %v990
      %vm994 = vc.u32 %v988, %v990
      %v995 = vadd.s32 %v991, 1
      %v996 = vsel %vm994, %v995, %v991
      %v997 = vadd.s32 %v992, %v996
      %v998 = vadd.s32 %v997, 536870912
      %v999 = vshrl.u32 %v998, 30
      %v1000 = vshll.u32 %v999, 30
      %v1001 = vsub.s32 %v997, %v1000
      %vm1002 = vcmp.lt.s32.totalorder %v1001, 0
      %v1003 = vsub.s32 0, %v1001
      %v1004 = vsel %vm1002, %v1003, %v1001
      %v1005 = vclz %v1004
      %v1006 = vsub.s32 %v1005, 2
      %vm1007 = vcmp.gt.s32.totalorder 0, %v1006
      %v1008 = vsel %vm1007, 0, %v1006
      %v1009 = vsub.s32 32, %v1008
      %v1010 = vshll.u32 %v1001, %v1008
      %v1011 = vshrl.u32 %v993, %v1009
      %v1012 = vor.u32 %v1010, %v1011
      %v1013 = vsub.s32 4294967266, %v1008
      %v1014 = vadd.s32 %v1013, 127
      %v1015 = vshll.u32 %v1014, 23
      %v1016 = vor.u32 4788187, %v1015
      %v1017 = vand.u32 2147483647, %v1016
      %v1019 = vcvt.s32.f32 %v1012
      %v1020 = vmul.f32 %v1019, %v1017
      %v1021 = vxor.u32 %v1020, 2147483648
      %v1022 = vsel %vm939, %v1021, %v1020
      %v1023 = vsub.s32 4, %v999
      %v1024 = vsel %vm939, %v1023, %v999
      %v1025 = vsel %vm938, %v830, %v1022
      %v1026 = vsel %vm938, 0, %v1024
      %v1027 = vcosq.f32.pop %v1025
      %v1028 = vsinq.f32.pop %v1025
      %vm1029 = vweird.f32 %v830
      %v1030 = vadd.s32 %v1026, 3
      %v1031 = vand.u32 %v1030, 3
      %vm1032 = vcmp.lt.s32.totalorder %v1031, 2
      %vm1033 = vcmp.eq.s32.totalorder %v1031, 0
      %v1034 = vxor.u32 %v1028, 2147483648
      %v1035 = vsel %vm1033, %v1027, %v1034
      %vm1036 = vcmp.eq.s32.totalorder %v1031, 2
      %v1037 = vxor.u32 %v1027, 2147483648
      %v1038 = vsel %vm1036, %v1037, %v1028
      %v1039 = vsel %vm1032, %v1035, %v1038
      %v1040 = vsel %vm1029, nan, %v1039
      %v1041 = vand.u32 2147483647, %v831
      %vm1042 = vcmp.le.f32.partialorder %v1041, 0.7853982
      %vm1043 = vcmp.lt.s32.totalorder %v831, 0
      %v1044 = vand.u32 %v831, 2139095040
      %v1045 = vshrl.u32 %v1044, 23
      %v1046 = vsub.s32 %v1045, 127
      %v1047 = vand.u32 2147483647, %v831
      %v1048 = vand.u32 %v1047, 8388607
      %v1049 = vor.u32 %v1048, 8388608
      %v1050 = vsub.s32 0, %v1049
      %v1051 = vadd.s32 %v1046, 1
      %vm1052 = vcmp.gt.s32.totalorder %v1051, 0
      %v1053 = vsel %vm1052, %v1051, 0
      %v1054 = vshrl.u32 %v1053, 5
      %v1055 = vand.u32 %v1053, 31
      %v1056 = vsub.s32 32, %v1055
      %v1057 = vshrl.u32 683565275, %v1056
      %v1058 = vshll.u32 683565275, %v1055
      %v1059 = vshrl.u32 2475754826, %v1056
      %v1060 = vor.u32 %v1058, %v1059
      %v1061 = vshll.u32 2475754826, %v1055
      %v1062 = vshrl.u32 2131351028, %v1056
      %v1063 = vor.u32 %v1061, %v1062
      %v1064 = vshll.u32 2131351028, %v1055
      %v1065 = vshrl.u32 2102212464, %v1056
      %v1066 = vor.u32 %v1064, %v1065
      %v1067 = vshll.u32 2102212464, %v1055
      %v1068 = vshrl.u32 920167782, %v1056
      %v1069 = vor.u32 %v1067, %v1068
      %v1070 = vshll.u32 920167782, %v1055
      %v1071 = vshrl.u32 1326507024, %v1056
      %v1072 = vor.u32 %v1070, %v1071
      %vm1073 = vcmp.lt.s32.totalorder %v1054, 1
      %vm1074 = vcmp.lt.s32.totalorder %v1054, 2
      %vm1075 = vcmp.lt.s32.totalorder %v1054, 3
      %vm1076 = vcmp.lt.s32.totalorder %v1054, 4
      %v1077 = vsel %vm1073, %v1057, %v1060
      %v1078 = vsel %vm1076, %v1066, 2102212464
      %v1079 = vsel %vm1075, %v1063, %v1078
      %v1080 = vsel %vm1074, %v1077, %v1079
      %v1081 = vsel %vm1073, %v1060, %v1063
      %v1082 = vsel %vm1076, %v1069, 920167782
      %v1083 = vsel %vm1075, %v1066, %v1082
      %v1084 = vsel %vm1074, %v1081, %v1083
      %v1085 = vsel %vm1073, %v1063, %v1066
      %v1086 = vsel %vm1076, %v1072, 1326507024
      %v1087 = vsel %vm1075, %v1069, %v1086
      %v1088 = vsel %vm1074, %v1085, %v1087
      %v1089 = vshll.u32 %v1049, 8
      %v1090 = vmul.u32.u64.compose %v1089, %v1088
      %v1091 = vextract.low.u32 %v1090
      %v1092 = vextract.high.u32 %v1090
      %v1093 = vmul.u32.u64.compose %v1089, %v1084
      %v1094 = vextract.low.u32 %v1093
      %v1095 = vextract.high.u32 %v1093
      %v1096 = vmul.u32 %v1089, %v1080
      %v1097 = vadd.s32 %v1092, %v1094
      %vm1098 = vc.u32 %v1092, %v1094
      %v1099 = vadd.s32 %v1095, 1
      %v1100 = vsel %vm1098, %v1099, %v1095
      %v1101 = vadd.s32 %v1096, %v1100
      %v1102 = vadd.s32 %v1101, 536870912
      %v1103 = vshrl.u32 %v1102, 30
      %v1104 = vshll.u32 %v1103, 30
      %v1105 = vsub.s32 %v1101, %v1104
      %vm1106 = vcmp.lt.s32.totalorder %v1105, 0
      %v1107 = vsub.s32 0, %v1105
      %v1108 = vsel %vm1106, %v1107, %v1105
      %v1109 = vclz %v1108
      %v1110 = vsub.s32 %v1109, 2
      %vm1111 = vcmp.gt.s32.totalorder 0, %v1110
      %v1112 = vsel %vm1111, 0, %v1110
      %v1113 = vsub.s32 32, %v1112
      %v1114 = vshll.u32 %v1105, %v1112
      %v1115 = vshrl.u32 %v1097, %v1113
      %v1116 = vor.u32 %v1114, %v1115
      %v1117 = vsub.s32 4294967266, %v1112
      %v1118 = vadd.s32 %v1117, 127
      %v1119 = vshll.u32 %v1118, 23
      %v1120 = vor.u32 4788187, %v1119
      %v1121 = vand.u32 2147483647, %v1120
      %v1123 = vcvt.s32.f32 %v1116
      %v1124 = vmul.f32 %v1123, %v1121
      %v1125 = vxor.u32 %v1124, 2147483648
      %v1126 = vsel %vm1043, %v1125, %v1124
      %v1127 = vsub.s32 4, %v1103
      %v1128 = vsel %vm1043, %v1127, %v1103
      %v1129 = vsel %vm1042, %v831, %v1126
      %v1130 = vsel %vm1042, 0, %v1128
      %v1131 = vcosq.f32.pop %v1129
      %v1132 = vsinq.f32.pop %v1129
      %vm1133 = vweird.f32 %v831
      %v1134 = vadd.s32 %v1130, 3
      %v1135 = vand.u32 %v1134, 3
      %vm1136 = vcmp.lt.s32.totalorder %v1135, 2
      %vm1137 = vcmp.eq.s32.totalorder %v1135, 0
      %v1138 = vxor.u32 %v1132, 2147483648
      %v1139 = vsel %vm1137, %v1131, %v1138
      %vm1140 = vcmp.eq.s32.totalorder %v1135, 2
      %v1141 = vxor.u32 %v1131, 2147483648
      %v1142 = vsel %vm1140, %v1141, %v1132
      %v1143 = vsel %vm1136, %v1139, %v1142
      %v1144 = vsel %vm1133, nan, %v1143
      %v1145 = vand.u32 2147483647, %v832
      %vm1146 = vcmp.le.f32.partialorder %v1145, 0.7853982
      %vm1147 = vcmp.lt.s32.totalorder %v832, 0
      %v1148 = vand.u32 %v832, 2139095040
      %v1149 = vshrl.u32 %v1148, 23
      %v1150 = vsub.s32 %v1149, 127
      %v1151 = vand.u32 2147483647, %v832
      %v1152 = vand.u32 %v1151, 8388607
      %v1153 = vor.u32 %v1152, 8388608
      %v1154 = vsub.s32 0, %v1153
      %v1155 = vadd.s32 %v1150, 1
      %vm1156 = vcmp.gt.s32.totalorder %v1155, 0
      %v1157 = vsel %vm1156, %v1155, 0
      %v1158 = vshrl.u32 %v1157, 5
      %v1159 = vand.u32 %v1157, 31
      %v1160 = vsub.s32 32, %v1159
      %v1161 = vshrl.u32 683565275, %v1160
      %v1162 = vshll.u32 683565275, %v1159
      %v1163 = vshrl.u32 2475754826, %v1160
      %v1164 = vor.u32 %v1162, %v1163
      %v1165 = vshll.u32 2475754826, %v1159
      %v1166 = vshrl.u32 2131351028, %v1160
      %v1167 = vor.u32 %v1165, %v1166
      %v1168 = vshll.u32 2131351028, %v1159
      %v1169 = vshrl.u32 2102212464, %v1160
      %v1170 = vor.u32 %v1168, %v1169
      %v1171 = vshll.u32 2102212464, %v1159
      %v1172 = vshrl.u32 920167782, %v1160
      %v1173 = vor.u32 %v1171, %v1172
      %v1174 = vshll.u32 920167782, %v1159
      %v1175 = vshrl.u32 1326507024, %v1160
      %v1176 = vor.u32 %v1174, %v1175
      %vm1177 = vcmp.lt.s32.totalorder %v1158, 1
      %vm1178 = vcmp.lt.s32.totalorder %v1158, 2
      %vm1179 = vcmp.lt.s32.totalorder %v1158, 3
      %vm1180 = vcmp.lt.s32.totalorder %v1158, 4
      %v1181 = vsel %vm1177, %v1161, %v1164
      %v1182 = vsel %vm1180, %v1170, 2102212464
      %v1183 = vsel %vm1179, %v1167, %v1182
      %v1184 = vsel %vm1178, %v1181, %v1183
      %v1185 = vsel %vm1177, %v1164, %v1167
      %v1186 = vsel %vm1180, %v1173, 920167782
      %v1187 = vsel %vm1179, %v1170, %v1186
      %v1188 = vsel %vm1178, %v1185, %v1187
      %v1189 = vsel %vm1177, %v1167, %v1170
      %v1190 = vsel %vm1180, %v1176, 1326507024
      %v1191 = vsel %vm1179, %v1173, %v1190
      %v1192 = vsel %vm1178, %v1189, %v1191
      %v1193 = vshll.u32 %v1153, 8
      %v1194 = vmul.u32.u64.compose %v1193, %v1192
      %v1195 = vextract.low.u32 %v1194
      %v1196 = vextract.high.u32 %v1194
      %v1197 = vmul.u32.u64.compose %v1193, %v1188
      %v1198 = vextract.low.u32 %v1197
      %v1199 = vextract.high.u32 %v1197
      %v1200 = vmul.u32 %v1193, %v1184
      %v1201 = vadd.s32 %v1196, %v1198
      %vm1202 = vc.u32 %v1196, %v1198
      %v1203 = vadd.s32 %v1199, 1
      %v1204 = vsel %vm1202, %v1203, %v1199
      %v1205 = vadd.s32 %v1200, %v1204
      %v1206 = vadd.s32 %v1205, 536870912
      %v1207 = vshrl.u32 %v1206, 30
      %v1208 = vshll.u32 %v1207, 30
      %v1209 = vsub.s32 %v1205, %v1208
      %vm1210 = vcmp.lt.s32.totalorder %v1209, 0
      %v1211 = vsub.s32 0, %v1209
      %v1212 = vsel %vm1210, %v1211, %v1209
      %v1213 = vclz %v1212
      %v1214 = vsub.s32 %v1213, 2
      %vm1215 = vcmp.gt.s32.totalorder 0, %v1214
      %v1216 = vsel %vm1215, 0, %v1214
      %v1217 = vsub.s32 32, %v1216
      %v1218 = vshll.u32 %v1209, %v1216
      %v1219 = vshrl.u32 %v1201, %v1217
      %v1220 = vor.u32 %v1218, %v1219
      %v1221 = vsub.s32 4294967266, %v1216
      %v1222 = vadd.s32 %v1221, 127
      %v1223 = vshll.u32 %v1222, 23
      %v1224 = vor.u32 4788187, %v1223
      %v1225 = vand.u32 2147483647, %v1224
      %v1227 = vcvt.s32.f32 %v1220
      %v1228 = vmul.f32 %v1227, %v1225
      %v1229 = vxor.u32 %v1228, 2147483648
      %v1230 = vsel %vm1147, %v1229, %v1228
      %v1231 = vsub.s32 4, %v1207
      %v1232 = vsel %vm1147, %v1231, %v1207
      %v1233 = vsel %vm1146, %v832, %v1230
      %v1234 = vsel %vm1146, 0, %v1232
      %v1235 = vcosq.f32.pop %v1233
      %v1236 = vsinq.f32.pop %v1233
      %vm1237 = vweird.f32 %v832
      %v1238 = vadd.s32 %v1234, 3
      %v1239 = vand.u32 %v1238, 3
      %vm1240 = vcmp.lt.s32.totalorder %v1239, 2
      %vm1241 = vcmp.eq.s32.totalorder %v1239, 0
      %v1242 = vxor.u32 %v1236, 2147483648
      %v1243 = vsel %vm1241, %v1235, %v1242
      %vm1244 = vcmp.eq.s32.totalorder %v1239, 2
      %v1245 = vxor.u32 %v1235, 2147483648
      %v1246 = vsel %vm1244, %v1245, %v1236
      %v1247 = vsel %vm1240, %v1243, %v1246
      %v1248 = vsel %vm1237, nan, %v1247
      %1249 = vst [vmem:[%s327 + $0x8] sm:$0xff] %v936
      %1250 = vst [vmem:[%s327 + $0x28] sm:$0xff] %v1040
      %1251 = vst [vmem:[%s327 + $0x48] sm:$0xff] %v1144
      %1252 = vst [vmem:[%s327 + $0x68] sm:$0xff] %v1248
      %v1253 = vld [vmem:[%s316] sm:$0x1]
      %v1254 = vld [vmem:[%s316 + $0x1] sm:$0x1]
      %v1255 = vld [vmem:[%s316 + $0x2] sm:$0x1]
      %v1256 = vld [vmem:[%s316 + $0x3] sm:$0x1]
      %v1261 = vlaneseq
      %v1262 = vshrl.u32 %v1261, 7
      %v1263 = vsub.s32 0, %v1262
      %v1264 = vrot.slane %v1253, %v1263
      %v1265 = vlaneseq
      %v1266 = vshrl.u32 %v1265, 7
      %v1267 = vsub.s32 0, %v1266
      %v1268 = vrot.slane %v1254, %v1267
      %v1269 = vlaneseq
      %v1270 = vshrl.u32 %v1269, 7
      %v1271 = vsub.s32 0, %v1270
      %v1272 = vrot.slane %v1255, %v1271
      %v1273 = vlaneseq
      %v1274 = vshrl.u32 %v1273, 7
      %v1275 = vsub.s32 0, %v1274
      %v1276 = vrot.slane %v1256, %v1275
      %v1281 = vmul.f32 %v1264, %v362
      %v1282 = vmul.f32 %v1268, %v362
      %v1283 = vmul.f32 %v1272, %v362
      %v1284 = vmul.f32 %v1276, %v362
      %v1285 = vadd.f32 %v1281, %v371
      %v1286 = vadd.f32 %v1282, %v371
      %v1287 = vadd.f32 %v1283, %v371
      %v1288 = vadd.f32 %v1284, %v371
      %v1289 = vand.u32 2147483647, %v1285
      %vm1290 = vcmp.le.f32.partialorder %v1289, 0.7853982
      %vm1291 = vcmp.lt.s32.totalorder %v1285, 0
      %v1292 = vand.u32 %v1285, 2139095040
      %v1293 = vshrl.u32 %v1292, 23
      %v1294 = vsub.s32 %v1293, 127
      %v1295 = vand.u32 2147483647, %v1285
      %v1296 = vand.u32 %v1295, 8388607
      %v1297 = vor.u32 %v1296, 8388608
      %v1298 = vsub.s32 0, %v1297
      %v1299 = vadd.s32 %v1294, 1
      %vm1300 = vcmp.gt.s32.totalorder %v1299, 0
      %v1301 = vsel %vm1300, %v1299, 0
      %v1302 = vshrl.u32 %v1301, 5
      %v1303 = vand.u32 %v1301, 31
      %v1304 = vsub.s32 32, %v1303
      %v1305 = vshrl.u32 683565275, %v1304
      %v1306 = vshll.u32 683565275, %v1303
      %v1307 = vshrl.u32 2475754826, %v1304
      %v1308 = vor.u32 %v1306, %v1307
      %v1309 = vshll.u32 2475754826, %v1303
      %v1310 = vshrl.u32 2131351028, %v1304
      %v1311 = vor.u32 %v1309, %v1310
      %v1312 = vshll.u32 2131351028, %v1303
      %v1313 = vshrl.u32 2102212464, %v1304
      %v1314 = vor.u32 %v1312, %v1313
      %v1315 = vshll.u32 2102212464, %v1303
      %v1316 = vshrl.u32 920167782, %v1304
      %v1317 = vor.u32 %v1315, %v1316
      %v1318 = vshll.u32 920167782, %v1303
      %v1319 = vshrl.u32 1326507024, %v1304
      %v1320 = vor.u32 %v1318, %v1319
      %vm1321 = vcmp.lt.s32.totalorder %v1302, 1
      %vm1322 = vcmp.lt.s32.totalorder %v1302, 2
      %vm1323 = vcmp.lt.s32.totalorder %v1302, 3
      %vm1324 = vcmp.lt.s32.totalorder %v1302, 4
      %v1325 = vsel %vm1321, %v1305, %v1308
      %v1326 = vsel %vm1324, %v1314, 2102212464
      %v1327 = vsel %vm1323, %v1311, %v1326
      %v1328 = vsel %vm1322, %v1325, %v1327
      %v1329 = vsel %vm1321, %v1308, %v1311
      %v1330 = vsel %vm1324, %v1317, 920167782
      %v1331 = vsel %vm1323, %v1314, %v1330
      %v1332 = vsel %vm1322, %v1329, %v1331
      %v1333 = vsel %vm1321, %v1311, %v1314
      %v1334 = vsel %vm1324, %v1320, 1326507024
      %v1335 = vsel %vm1323, %v1317, %v1334
      %v1336 = vsel %vm1322, %v1333, %v1335
      %v1337 = vshll.u32 %v1297, 8
      %v1338 = vmul.u32.u64.compose %v1337, %v1336
      %v1339 = vextract.low.u32 %v1338
      %v1340 = vextract.high.u32 %v1338
      %v1341 = vmul.u32.u64.compose %v1337, %v1332
      %v1342 = vextract.low.u32 %v1341
      %v1343 = vextract.high.u32 %v1341
      %v1344 = vmul.u32 %v1337, %v1328
      %v1345 = vadd.s32 %v1340, %v1342
      %vm1346 = vc.u32 %v1340, %v1342
      %v1347 = vadd.s32 %v1343, 1
      %v1348 = vsel %vm1346, %v1347, %v1343
      %v1349 = vadd.s32 %v1344, %v1348
      %v1350 = vadd.s32 %v1349, 536870912
      %v1351 = vshrl.u32 %v1350, 30
      %v1352 = vshll.u32 %v1351, 30
      %v1353 = vsub.s32 %v1349, %v1352
      %vm1354 = vcmp.lt.s32.totalorder %v1353, 0
      %v1355 = vsub.s32 0, %v1353
      %v1356 = vsel %vm1354, %v1355, %v1353
      %v1357 = vclz %v1356
      %v1358 = vsub.s32 %v1357, 2
      %vm1359 = vcmp.gt.s32.totalorder 0, %v1358
      %v1360 = vsel %vm1359, 0, %v1358
      %v1361 = vsub.s32 32, %v1360
      %v1362 = vshll.u32 %v1353, %v1360
      %v1363 = vshrl.u32 %v1345, %v1361
      %v1364 = vor.u32 %v1362, %v1363
      %v1365 = vsub.s32 4294967266, %v1360
      %v1366 = vadd.s32 %v1365, 127
      %v1367 = vshll.u32 %v1366, 23
      %v1368 = vor.u32 4788187, %v1367
      %v1369 = vand.u32 2147483647, %v1368
      %v1371 = vcvt.s32.f32 %v1364
      %v1372 = vmul.f32 %v1371, %v1369
      %v1373 = vxor.u32 %v1372, 2147483648
      %v1374 = vsel %vm1291, %v1373, %v1372
      %v1375 = vsub.s32 4, %v1351
      %v1376 = vsel %vm1291, %v1375, %v1351
      %v1377 = vsel %vm1290, %v1285, %v1374
      %v1378 = vsel %vm1290, 0, %v1376
      %v1379 = vcosq.f32.pop %v1377
      %v1380 = vsinq.f32.pop %v1377
      %vm1381 = vweird.f32 %v1285
      %v1382 = vadd.s32 %v1378, 3
      %v1383 = vand.u32 %v1382, 3
      %vm1384 = vcmp.lt.s32.totalorder %v1383, 2
      %vm1385 = vcmp.eq.s32.totalorder %v1383, 0
      %v1386 = vxor.u32 %v1380, 2147483648
      %v1387 = vsel %vm1385, %v1379, %v1386
      %vm1388 = vcmp.eq.s32.totalorder %v1383, 2
      %v1389 = vxor.u32 %v1379, 2147483648
      %v1390 = vsel %vm1388, %v1389, %v1380
      %v1391 = vsel %vm1384, %v1387, %v1390
      %v1392 = vsel %vm1381, nan, %v1391
      %v1393 = vand.u32 2147483647, %v1286
      %vm1394 = vcmp.le.f32.partialorder %v1393, 0.7853982
      %vm1395 = vcmp.lt.s32.totalorder %v1286, 0
      %v1396 = vand.u32 %v1286, 2139095040
      %v1397 = vshrl.u32 %v1396, 23
      %v1398 = vsub.s32 %v1397, 127
      %v1399 = vand.u32 2147483647, %v1286
      %v1400 = vand.u32 %v1399, 8388607
      %v1401 = vor.u32 %v1400, 8388608
      %v1402 = vsub.s32 0, %v1401
      %v1403 = vadd.s32 %v1398, 1
      %vm1404 = vcmp.gt.s32.totalorder %v1403, 0
      %v1405 = vsel %vm1404, %v1403, 0
      %v1406 = vshrl.u32 %v1405, 5
      %v1407 = vand.u32 %v1405, 31
      %v1408 = vsub.s32 32, %v1407
      %v1409 = vshrl.u32 683565275, %v1408
      %v1410 = vshll.u32 683565275, %v1407
      %v1411 = vshrl.u32 2475754826, %v1408
      %v1412 = vor.u32 %v1410, %v1411
      %v1413 = vshll.u32 2475754826, %v1407
      %v1414 = vshrl.u32 2131351028, %v1408
      %v1415 = vor.u32 %v1413, %v1414
      %v1416 = vshll.u32 2131351028, %v1407
      %v1417 = vshrl.u32 2102212464, %v1408
      %v1418 = vor.u32 %v1416, %v1417
      %v1419 = vshll.u32 2102212464, %v1407
      %v1420 = vshrl.u32 920167782, %v1408
      %v1421 = vor.u32 %v1419, %v1420
      %v1422 = vshll.u32 920167782, %v1407
      %v1423 = vshrl.u32 1326507024, %v1408
      %v1424 = vor.u32 %v1422, %v1423
      %vm1425 = vcmp.lt.s32.totalorder %v1406, 1
      %vm1426 = vcmp.lt.s32.totalorder %v1406, 2
      %vm1427 = vcmp.lt.s32.totalorder %v1406, 3
      %vm1428 = vcmp.lt.s32.totalorder %v1406, 4
      %v1429 = vsel %vm1425, %v1409, %v1412
      %v1430 = vsel %vm1428, %v1418, 2102212464
      %v1431 = vsel %vm1427, %v1415, %v1430
      %v1432 = vsel %vm1426, %v1429, %v1431
      %v1433 = vsel %vm1425, %v1412, %v1415
      %v1434 = vsel %vm1428, %v1421, 920167782
      %v1435 = vsel %vm1427, %v1418, %v1434
      %v1436 = vsel %vm1426, %v1433, %v1435
      %v1437 = vsel %vm1425, %v1415, %v1418
      %v1438 = vsel %vm1428, %v1424, 1326507024
      %v1439 = vsel %vm1427, %v1421, %v1438
      %v1440 = vsel %vm1426, %v1437, %v1439
      %v1441 = vshll.u32 %v1401, 8
      %v1442 = vmul.u32.u64.compose %v1441, %v1440
      %v1443 = vextract.low.u32 %v1442
      %v1444 = vextract.high.u32 %v1442
      %v1445 = vmul.u32.u64.compose %v1441, %v1436
      %v1446 = vextract.low.u32 %v1445
      %v1447 = vextract.high.u32 %v1445
      %v1448 = vmul.u32 %v1441, %v1432
      %v1449 = vadd.s32 %v1444, %v1446
      %vm1450 = vc.u32 %v1444, %v1446
      %v1451 = vadd.s32 %v1447, 1
      %v1452 = vsel %vm1450, %v1451, %v1447
      %v1453 = vadd.s32 %v1448, %v1452
      %v1454 = vadd.s32 %v1453, 536870912
      %v1455 = vshrl.u32 %v1454, 30
      %v1456 = vshll.u32 %v1455, 30
      %v1457 = vsub.s32 %v1453, %v1456
      %vm1458 = vcmp.lt.s32.totalorder %v1457, 0
      %v1459 = vsub.s32 0, %v1457
      %v1460 = vsel %vm1458, %v1459, %v1457
      %v1461 = vclz %v1460
      %v1462 = vsub.s32 %v1461, 2
      %vm1463 = vcmp.gt.s32.totalorder 0, %v1462
      %v1464 = vsel %vm1463, 0, %v1462
      %v1465 = vsub.s32 32, %v1464
      %v1466 = vshll.u32 %v1457, %v1464
      %v1467 = vshrl.u32 %v1449, %v1465
      %v1468 = vor.u32 %v1466, %v1467
      %v1469 = vsub.s32 4294967266, %v1464
      %v1470 = vadd.s32 %v1469, 127
      %v1471 = vshll.u32 %v1470, 23
      %v1472 = vor.u32 4788187, %v1471
      %v1473 = vand.u32 2147483647, %v1472
      %v1475 = vcvt.s32.f32 %v1468
      %v1476 = vmul.f32 %v1475, %v1473
      %v1477 = vxor.u32 %v1476, 2147483648
      %v1478 = vsel %vm1395, %v1477, %v1476
      %v1479 = vsub.s32 4, %v1455
      %v1480 = vsel %vm1395, %v1479, %v1455
      %v1481 = vsel %vm1394, %v1286, %v1478
      %v1482 = vsel %vm1394, 0, %v1480
      %v1483 = vcosq.f32.pop %v1481
      %v1484 = vsinq.f32.pop %v1481
      %vm1485 = vweird.f32 %v1286
      %v1486 = vadd.s32 %v1482, 3
      %v1487 = vand.u32 %v1486, 3
      %vm1488 = vcmp.lt.s32.totalorder %v1487, 2
      %vm1489 = vcmp.eq.s32.totalorder %v1487, 0
      %v1490 = vxor.u32 %v1484, 2147483648
      %v1491 = vsel %vm1489, %v1483, %v1490
      %vm1492 = vcmp.eq.s32.totalorder %v1487, 2
      %v1493 = vxor.u32 %v1483, 2147483648
      %v1494 = vsel %vm1492, %v1493, %v1484
      %v1495 = vsel %vm1488, %v1491, %v1494
      %v1496 = vsel %vm1485, nan, %v1495
      %v1497 = vand.u32 2147483647, %v1287
      %vm1498 = vcmp.le.f32.partialorder %v1497, 0.7853982
      %vm1499 = vcmp.lt.s32.totalorder %v1287, 0
      %v1500 = vand.u32 %v1287, 2139095040
      %v1501 = vshrl.u32 %v1500, 23
      %v1502 = vsub.s32 %v1501, 127
      %v1503 = vand.u32 2147483647, %v1287
      %v1504 = vand.u32 %v1503, 8388607
      %v1505 = vor.u32 %v1504, 8388608
      %v1506 = vsub.s32 0, %v1505
      %v1507 = vadd.s32 %v1502, 1
      %vm1508 = vcmp.gt.s32.totalorder %v1507, 0
      %v1509 = vsel %vm1508, %v1507, 0
      %v1510 = vshrl.u32 %v1509, 5
      %v1511 = vand.u32 %v1509, 31
      %v1512 = vsub.s32 32, %v1511
      %v1513 = vshrl.u32 683565275, %v1512
      %v1514 = vshll.u32 683565275, %v1511
      %v1515 = vshrl.u32 2475754826, %v1512
      %v1516 = vor.u32 %v1514, %v1515
      %v1517 = vshll.u32 2475754826, %v1511
      %v1518 = vshrl.u32 2131351028, %v1512
      %v1519 = vor.u32 %v1517, %v1518
      %v1520 = vshll.u32 2131351028, %v1511
      %v1521 = vshrl.u32 2102212464, %v1512
      %v1522 = vor.u32 %v1520, %v1521
      %v1523 = vshll.u32 2102212464, %v1511
      %v1524 = vshrl.u32 920167782, %v1512
      %v1525 = vor.u32 %v1523, %v1524
      %v1526 = vshll.u32 920167782, %v1511
      %v1527 = vshrl.u32 1326507024, %v1512
      %v1528 = vor.u32 %v1526, %v1527
      %vm1529 = vcmp.lt.s32.totalorder %v1510, 1
      %vm1530 = vcmp.lt.s32.totalorder %v1510, 2
      %vm1531 = vcmp.lt.s32.totalorder %v1510, 3
      %vm1532 = vcmp.lt.s32.totalorder %v1510, 4
      %v1533 = vsel %vm1529, %v1513, %v1516
      %v1534 = vsel %vm1532, %v1522, 2102212464
      %v1535 = vsel %vm1531, %v1519, %v1534
      %v1536 = vsel %vm1530, %v1533, %v1535
      %v1537 = vsel %vm1529, %v1516, %v1519
      %v1538 = vsel %vm1532, %v1525, 920167782
      %v1539 = vsel %vm1531, %v1522, %v1538
      %v1540 = vsel %vm1530, %v1537, %v1539
      %v1541 = vsel %vm1529, %v1519, %v1522
      %v1542 = vsel %vm1532, %v1528, 1326507024
      %v1543 = vsel %vm1531, %v1525, %v1542
      %v1544 = vsel %vm1530, %v1541, %v1543
      %v1545 = vshll.u32 %v1505, 8
      %v1546 = vmul.u32.u64.compose %v1545, %v1544
      %v1547 = vextract.low.u32 %v1546
      %v1548 = vextract.high.u32 %v1546
      %v1549 = vmul.u32.u64.compose %v1545, %v1540
      %v1550 = vextract.low.u32 %v1549
      %v1551 = vextract.high.u32 %v1549
      %v1552 = vmul.u32 %v1545, %v1536
      %v1553 = vadd.s32 %v1548, %v1550
      %vm1554 = vc.u32 %v1548, %v1550
      %v1555 = vadd.s32 %v1551, 1
      %v1556 = vsel %vm1554, %v1555, %v1551
      %v1557 = vadd.s32 %v1552, %v1556
      %v1558 = vadd.s32 %v1557, 536870912
      %v1559 = vshrl.u32 %v1558, 30
      %v1560 = vshll.u32 %v1559, 30
      %v1561 = vsub.s32 %v1557, %v1560
      %vm1562 = vcmp.lt.s32.totalorder %v1561, 0
      %v1563 = vsub.s32 0, %v1561
      %v1564 = vsel %vm1562, %v1563, %v1561
      %v1565 = vclz %v1564
      %v1566 = vsub.s32 %v1565, 2
      %vm1567 = vcmp.gt.s32.totalorder 0, %v1566
      %v1568 = vsel %vm1567, 0, %v1566
      %v1569 = vsub.s32 32, %v1568
      %v1570 = vshll.u32 %v1561, %v1568
      %v1571 = vshrl.u32 %v1553, %v1569
      %v1572 = vor.u32 %v1570, %v1571
      %v1573 = vsub.s32 4294967266, %v1568
      %v1574 = vadd.s32 %v1573, 127
      %v1575 = vshll.u32 %v1574, 23
      %v1576 = vor.u32 4788187, %v1575
      %v1577 = vand.u32 2147483647, %v1576
      %v1579 = vcvt.s32.f32 %v1572
      %v1580 = vmul.f32 %v1579, %v1577
      %v1581 = vxor.u32 %v1580, 2147483648
      %v1582 = vsel %vm1499, %v1581, %v1580
      %v1583 = vsub.s32 4, %v1559
      %v1584 = vsel %vm1499, %v1583, %v1559
      %v1585 = vsel %vm1498, %v1287, %v1582
      %v1586 = vsel %vm1498, 0, %v1584
      %v1587 = vcosq.f32.pop %v1585
      %v1588 = vsinq.f32.pop %v1585
      %vm1589 = vweird.f32 %v1287
      %v1590 = vadd.s32 %v1586, 3
      %v1591 = vand.u32 %v1590, 3
      %vm1592 = vcmp.lt.s32.totalorder %v1591, 2
      %vm1593 = vcmp.eq.s32.totalorder %v1591, 0
      %v1594 = vxor.u32 %v1588, 2147483648
      %v1595 = vsel %vm1593, %v1587, %v1594
      %vm1596 = vcmp.eq.s32.totalorder %v1591, 2
      %v1597 = vxor.u32 %v1587, 2147483648
      %v1598 = vsel %vm1596, %v1597, %v1588
      %v1599 = vsel %vm1592, %v1595, %v1598
      %v1600 = vsel %vm1589, nan, %v1599
      %v1601 = vand.u32 2147483647, %v1288
      %vm1602 = vcmp.le.f32.partialorder %v1601, 0.7853982
      %vm1603 = vcmp.lt.s32.totalorder %v1288, 0
      %v1604 = vand.u32 %v1288, 2139095040
      %v1605 = vshrl.u32 %v1604, 23
      %v1606 = vsub.s32 %v1605, 127
      %v1607 = vand.u32 2147483647, %v1288
      %v1608 = vand.u32 %v1607, 8388607
      %v1609 = vor.u32 %v1608, 8388608
      %v1610 = vsub.s32 0, %v1609
      %v1611 = vadd.s32 %v1606, 1
      %vm1612 = vcmp.gt.s32.totalorder %v1611, 0
      %v1613 = vsel %vm1612, %v1611, 0
      %v1614 = vshrl.u32 %v1613, 5
      %v1615 = vand.u32 %v1613, 31
      %v1616 = vsub.s32 32, %v1615
      %v1617 = vshrl.u32 683565275, %v1616
      %v1618 = vshll.u32 683565275, %v1615
      %v1619 = vshrl.u32 2475754826, %v1616
      %v1620 = vor.u32 %v1618, %v1619
      %v1621 = vshll.u32 2475754826, %v1615
      %v1622 = vshrl.u32 2131351028, %v1616
      %v1623 = vor.u32 %v1621, %v1622
      %v1624 = vshll.u32 2131351028, %v1615
      %v1625 = vshrl.u32 2102212464, %v1616
      %v1626 = vor.u32 %v1624, %v1625
      %v1627 = vshll.u32 2102212464, %v1615
      %v1628 = vshrl.u32 920167782, %v1616
      %v1629 = vor.u32 %v1627, %v1628
      %v1630 = vshll.u32 920167782, %v1615
      %v1631 = vshrl.u32 1326507024, %v1616
      %v1632 = vor.u32 %v1630, %v1631
      %vm1633 = vcmp.lt.s32.totalorder %v1614, 1
      %vm1634 = vcmp.lt.s32.totalorder %v1614, 2
      %vm1635 = vcmp.lt.s32.totalorder %v1614, 3
      %vm1636 = vcmp.lt.s32.totalorder %v1614, 4
      %v1637 = vsel %vm1633, %v1617, %v1620
      %v1638 = vsel %vm1636, %v1626, 2102212464
      %v1639 = vsel %vm1635, %v1623, %v1638
      %v1640 = vsel %vm1634, %v1637, %v1639
      %v1641 = vsel %vm1633, %v1620, %v1623
      %v1642 = vsel %vm1636, %v1629, 920167782
      %v1643 = vsel %vm1635, %v1626, %v1642
      %v1644 = vsel %vm1634, %v1641, %v1643
      %v1645 = vsel %vm1633, %v1623, %v1626
      %v1646 = vsel %vm1636, %v1632, 1326507024
      %v1647 = vsel %vm1635, %v1629, %v1646
      %v1648 = vsel %vm1634, %v1645, %v1647
      %v1649 = vshll.u32 %v1609, 8
      %v1650 = vmul.u32.u64.compose %v1649, %v1648
      %v1651 = vextract.low.u32 %v1650
      %v1652 = vextract.high.u32 %v1650
      %v1653 = vmul.u32.u64.compose %v1649, %v1644
      %v1654 = vextract.low.u32 %v1653
      %v1655 = vextract.high.u32 %v1653
      %v1656 = vmul.u32 %v1649, %v1640
      %v1657 = vadd.s32 %v1652, %v1654
      %vm1658 = vc.u32 %v1652, %v1654
      %v1659 = vadd.s32 %v1655, 1
      %v1660 = vsel %vm1658, %v1659, %v1655
      %v1661 = vadd.s32 %v1656, %v1660
      %v1662 = vadd.s32 %v1661, 536870912
      %v1663 = vshrl.u32 %v1662, 30
      %v1664 = vshll.u32 %v1663, 30
      %v1665 = vsub.s32 %v1661, %v1664
      %vm1666 = vcmp.lt.s32.totalorder %v1665, 0
      %v1667 = vsub.s32 0, %v1665
      %v1668 = vsel %vm1666, %v1667, %v1665
      %v1669 = vclz %v1668
      %v1670 = vsub.s32 %v1669, 2
      %vm1671 = vcmp.gt.s32.totalorder 0, %v1670
      %v1672 = vsel %vm1671, 0, %v1670
      %v1673 = vsub.s32 32, %v1672
      %v1674 = vshll.u32 %v1665, %v1672
      %v1675 = vshrl.u32 %v1657, %v1673
      %v1676 = vor.u32 %v1674, %v1675
      %v1677 = vsub.s32 4294967266, %v1672
      %v1678 = vadd.s32 %v1677, 127
      %v1679 = vshll.u32 %v1678, 23
      %v1680 = vor.u32 4788187, %v1679
      %v1681 = vand.u32 2147483647, %v1680
      %v1683 = vcvt.s32.f32 %v1676
      %v1684 = vmul.f32 %v1683, %v1681
      %v1685 = vxor.u32 %v1684, 2147483648
      %v1686 = vsel %vm1603, %v1685, %v1684
      %v1687 = vsub.s32 4, %v1663
      %v1688 = vsel %vm1603, %v1687, %v1663
      %v1689 = vsel %vm1602, %v1288, %v1686
      %v1690 = vsel %vm1602, 0, %v1688
      %v1691 = vcosq.f32.pop %v1689
      %v1692 = vsinq.f32.pop %v1689
      %vm1693 = vweird.f32 %v1288
      %v1694 = vadd.s32 %v1690, 3
      %v1695 = vand.u32 %v1694, 3
      %vm1696 = vcmp.lt.s32.totalorder %v1695, 2
      %vm1697 = vcmp.eq.s32.totalorder %v1695, 0
      %v1698 = vxor.u32 %v1692, 2147483648
      %v1699 = vsel %vm1697, %v1691, %v1698
      %vm1700 = vcmp.eq.s32.totalorder %v1695, 2
      %v1701 = vxor.u32 %v1691, 2147483648
      %v1702 = vsel %vm1700, %v1701, %v1692
      %v1703 = vsel %vm1696, %v1699, %v1702
      %v1704 = vsel %vm1693, nan, %v1703
      %1705 = vst [vmem:[%s327 + $0x10] sm:$0xff] %v1392
      %1706 = vst [vmem:[%s327 + $0x30] sm:$0xff] %v1496
      %1707 = vst [vmem:[%s327 + $0x50] sm:$0xff] %v1600
      %1708 = vst [vmem:[%s327 + $0x70] sm:$0xff] %v1704
      %1709 = vst [vmem:[%s327 + $0x18] sm:$0xf] 0.0
      %1710 = vst [vmem:[%s327 + $0x38] sm:$0xf] 0.0
      %1711 = vst [vmem:[%s327 + $0x58] sm:$0xf] 0.0
      %1712 = vst [vmem:[%s327 + $0x78] sm:$0xf] 0.0
      %s1713 = smul.u32 4, %s21
      %p1714 = scmp.lt.s32.totalorder %s20, 1
      %s1715 = scalar_select %p1714, %s20, 1
      %p1716 = scmp.lt.s32.totalorder %s1713, 3
      %s1717 = scalar_select %p1716, %s1713, 3
      %s1718 = smul.addr %s1717, 4
      %s1719 = smul.addr %s1715, 16
      %s1720 = sadd.s32 %s1718, %s1719
      %s1721 = smul.addr %s1720, 8
      %s1722 = scalar_lea.vmem %s5, %s1721
      // Predicated region
      $region41: #{tpu_custom_call.1} parent=39 // pred_check
        %p1723 = pneg %p174
      $region42: #{tpu_custom_call.1} parent=39 // pred_check_branch
        %1725 = sbr.rel (%p1723) target = $region44
      $region43: #{tpu_custom_call.1} parent=39 // pred_region
        %s1726 = smul.u32 4, %s21
      $region44: #{tpu_custom_call.1} parent=39 // pred_fallthru
        _
    $region40: #{tpu_custom_call.1} parent=5 // pred_fallthru
      _
    %p1727 = scmp.le.s32.totalorder 2, %s11
    // Predicated region
    $region45: #{tpu_custom_call.1} parent=5 // pred_check
      %p1728 = pneg %p1727
    $region46: #{tpu_custom_call.1} parent=5 // pred_check_branch
      %1730 = sbr.rel (%p1728) target = $region48
    $region47: #{tpu_custom_call.1} parent=5 // pred_region
      %s1731 = ssub.s32 %s11, 2
      // Predicated region
      $region49: #{tpu_custom_call.1} parent=47 // pred_check
        %p1732 = pneg %p180
      $region50: #{tpu_custom_call.1} parent=47 // pred_check_branch
        %1734 = sbr.rel (%p1732) target = $region52
      $region51: #{tpu_custom_call.1} parent=47 // pred_region
        %s1735 = smul.u32 4, %s23
        %p1736 = scmp.lt.s32.totalorder %s22, 1
        %s1737 = scalar_select %p1736, %s22, 1
        %p1738 = scmp.lt.s32.totalorder %s1735, 3
        %s1739 = scalar_select %p1738, %s1735, 3
        %s1740 = smul.addr %s1739, 4
        %s1741 = smul.addr %s1737, 16
        %s1742 = sadd.s32 %s1740, %s1741
        %s1743 = smul.addr %s1742, 8
        %s1744 = scalar_lea.vmem %s5, %s1743
      $region52: #{tpu_custom_call.1} parent=47 // pred_fallthru
        _
    $region48: #{tpu_custom_call.1} parent=5 // pred_fallthru
      _
  $region6: #{tpu_custom_call.1} parent=0 // loop_footer
    %s15 = sadd.s32 1, %s11
  $region7: #{tpu_custom_call.1} parent=0 // loop_footer_branch
    %10 = sbr.rel target = $region3
  $region8: #{tpu_custom_call.1} parent=0 // loop_exit
    _

</llo_original>
